<compile_context>
chip_gen: v6e
topology: v6e:2x2x1
jax: 0.10.0
libtpu: 0.0.40
codegen_flags: <defaults>
</compile_context>

<pallas_src>
import functools

import jax
import jax.numpy as jnp
from jax import lax
from jax.experimental import pallas as pl
from jax.experimental.pallas import tpu as pltpu


# ---------------------------------------------------------------------------
# Kernel 1: fused 2x2x2 max-pool + D/H zero-halo + lane-dense im2col (over
#           kd,kh only) + block-Toeplitz bf16 matmul + per-batch BN sums.
# ---------------------------------------------------------------------------
def _pool_conv_sums_kernel(x_ref, w_ref, y_ref, sum_ref, sq_ref,
                           xpad_ref, p_ref, *, K, pad, Dp, Hp, Wp, Cin, Cout):
    WC = Wp * Cin

    # ---- 2x2x2 max pool: 8 lane-dense slabs, tree max (no shuffles) ---------
    # x_ref block: (1, 8, Dp, Hp, Wp*Cin); axis 1 enumerates the (pd, ph, pw)
    # pooling parities, prepared on the host as a single swizzle.
    def slab(q):
        return x_ref[0, q]                              # (Dp, Hp, Wp*Cin)

    m01 = jnp.maximum(slab(0), slab(1))
    m23 = jnp.maximum(slab(2), slab(3))
    m45 = jnp.maximum(slab(4), slab(5))
    m67 = jnp.maximum(slab(6), slab(7))
    pooled = jnp.maximum(jnp.maximum(m01, m23), jnp.maximum(m45, m67))

    # ---- D/H zero halo only (W padding is implicit in the Toeplitz RHS) -----
    if pad > 0:
        zd = jnp.zeros((pad, Hp + 2 * pad, WC), jnp.float32)
        xpad_ref[0:pad, :, :] = zd
        xpad_ref[pad + Dp:2 * pad + Dp, :, :] = zd
        zh = jnp.zeros((Dp, pad, WC), jnp.float32)
        xpad_ref[pad:pad + Dp, 0:pad, :] = zh
        xpad_ref[pad:pad + Dp, pad + Hp:2 * pad + Hp, :] = zh
    xpad_ref[pad:pad + Dp, pad:pad + Hp, :] = pooled

    # ---- im2col over (kd, kh) only: K*K lane-dense 128-wide strips ----------
    for kd in range(K):
        for kh in range(K):
            idx = kd * K + kh
            blk = xpad_ref[kd:kd + Dp, kh:kh + Hp, :]   # (Dp, Hp, Wp*Cin)
            p_ref[:, idx * WC:(idx + 1) * WC] = (
                blk.reshape(Dp * Hp, WC).astype(jnp.bfloat16))

    # ---- single bf16 matmul, full 128-wide output (block-Toeplitz RHS) ------
    acc = jnp.dot(p_ref[...], w_ref[...],
                  preferred_element_type=jnp.float32)   # (Dp*Hp, Wp*Cout)

    # Per-batch partial sums for IIDBatchNorm (reduced on the host) from the
    # f32 accumulator; lane-dense (1, Wp*Cout) rows.
    sum_ref[0] = jnp.sum(acc, axis=0, keepdims=True)
    sq_ref[0] = jnp.sum(acc * acc, axis=0, keepdims=True)

    # bf16 intermediate (stats already taken in f32 above). No conv bias: the
    # per-field bias is exactly cancelled by the training-mode BN mean that
    # always follows in this module.
    y_ref[0] = acc.astype(jnp.bfloat16)


def pool_conv_sums(x_in, w_toep, *, K, pad, Dp, Hp, Wp, Cin, Cout):
    """x_in: (B, 8, Dp, Hp, Wp*Cin) f32; w_toep: (K*K*Wp*Cin, Wp*Cout) bf16."""
    B = x_in.shape[0]
    WCin, WCout = Wp * Cin, Wp * Cout
    kernel = functools.partial(_pool_conv_sums_kernel, K=K, pad=pad,
                               Dp=Dp, Hp=Hp, Wp=Wp, Cin=Cin, Cout=Cout)
    y, ssum, ssq = pl.pallas_call(
        kernel,
        out_shape=(
            jax.ShapeDtypeStruct((B, Dp * Hp, WCout), jnp.bfloat16),
            jax.ShapeDtypeStruct((B, 1, WCout), jnp.float32),
            jax.ShapeDtypeStruct((B, 1, WCout), jnp.float32),
        ),
        grid_spec=pltpu.PrefetchScalarGridSpec(
            num_scalar_prefetch=0,
            grid=(B,),
            in_specs=[
                pl.BlockSpec((1, 8, Dp, Hp, WCin), lambda b: (b, 0, 0, 0, 0)),
                pl.BlockSpec((K * K * WCin, WCout), lambda b: (0, 0)),
            ],
            out_specs=(
                pl.BlockSpec((1, Dp * Hp, WCout), lambda b: (b, 0, 0)),
                pl.BlockSpec((1, 1, WCout), lambda b: (b, 0, 0)),
                pl.BlockSpec((1, 1, WCout), lambda b: (b, 0, 0)),
            ),
            scratch_shapes=[
                pltpu.VMEM((Dp + 2 * pad, Hp + 2 * pad, WCin),
                           jnp.float32),                 # D/H-padded volume
                pltpu.VMEM((Dp * Hp, K * K * WCin),
                           jnp.bfloat16),                # im2col patches
            ],
        ),
        compiler_params=pltpu.CompilerParams(
            dimension_semantics=("parallel",),
            vmem_limit_bytes=32 * 1024 * 1024),
    )(x_in, w_toep)
    return y, ssum, ssq


# ---------------------------------------------------------------------------
# Kernel 2: fused batch-norm (precomputed per-lane scale / shift) + ReLU.
#           Reads the bf16 intermediate, writes the f32 module output.
# ---------------------------------------------------------------------------
def _bn_relu_kernel(y_ref, scale_ref, shift_ref, o_ref):
    o_ref[0] = jnp.maximum(
        y_ref[0].astype(jnp.float32) * scale_ref[...] + shift_ref[...], 0.0)


def _pick_row_tile(rows, cap=512):
    t = min(rows, cap)
    while t > 1 and rows % t != 0:
        t -= 1
    return t


def bn_relu(y, scale_lane, shift_lane):
    B, R, L = y.shape
    tr = _pick_row_tile(R)
    return pl.pallas_call(
        _bn_relu_kernel,
        out_shape=jax.ShapeDtypeStruct((B, R, L), jnp.float32),
        grid_spec=pltpu.PrefetchScalarGridSpec(
            num_scalar_prefetch=0,
            grid=(B, R // tr),
            in_specs=[
                pl.BlockSpec((1, tr, L), lambda b, r: (b, r, 0)),
                pl.BlockSpec((1, L), lambda b, r: (0, 0)),
                pl.BlockSpec((1, L), lambda b, r: (0, 0)),
            ],
            out_specs=pl.BlockSpec((1, tr, L), lambda b, r: (b, r, 0)),
        ),
        compiler_params=pltpu.CompilerParams(
            dimension_semantics=("parallel", "parallel"),
            vmem_limit_bytes=32 * 1024 * 1024),
    )(y, scale_lane, shift_lane)


# ---------------------------------------------------------------------------
# Host-side block-Toeplitz RHS: W taps (and implicit W zero-padding) expanded
# into a banded (K*K*Wp*Cin, Wp*Cout) matrix.
# ---------------------------------------------------------------------------
def toeplitz_rhs_along_w(w_dhwio, Wp, pad):
    K, _, _, Cin, Cout = w_dhwio.shape
    w_in = jnp.arange(Wp)
    w_out = jnp.arange(Wp)
    kw = w_in[:, None] - w_out[None, :] + pad            # (Wp_in, Wp_out)
    valid = (kw >= 0) & (kw < K)
    kw_c = jnp.clip(kw, 0, K - 1)
    w_g = w_dhwio[:, :, kw_c, :, :]                       # (K,K,Wp_in,Wp_out,Cin,Cout)
    t = jnp.where(valid[None, None, :, :, None, None], w_g, 0.0)
    t = jnp.transpose(t, (0, 1, 2, 4, 3, 5))              # (K,K,Wp_in,Cin,Wp_out,Cout)
    return t.reshape(K * K * Wp * Cin, Wp * Cout).astype(jnp.bfloat16)


# ---------------------------------------------------------------------------
# Module wrapper (parameter setup + glue in plain JAX).
# ---------------------------------------------------------------------------
class DownConvRot3d:
    def __init__(self, in_channels, out_channels, kernel_size, N, key):
        assert kernel_size % 2 == 1, "padding=(k-1)//2 'same' conv expects odd k"
        self.N = N
        self.K = kernel_size
        self.pad = (kernel_size - 1) // 2
        self.eps = 1e-5
        self.in_fields = in_channels
        self.out_fields = out_channels
        self.cin = in_channels * N
        self.cout = out_channels * N

        # TODO(synk): escnn's steerable-basis (equivariance-constrained) expansion
        # of the R3Conv weights is not reproduced; a dense filter of the same
        # effective shape (K, K, K, Cin, Cout) is used instead.
        fan_in = self.cin * self.K ** 3
        self.w_dhwio = jax.random.normal(
            key, (self.K, self.K, self.K, self.cin, self.cout), jnp.float32
        ) * (2.0 / fan_in) ** 0.5

        # NOTE: the R3Conv bias (one scalar per field, shared by the field's N
        # group channels) is exactly cancelled by the per-field training-mode
        # BN mean subtraction that always follows in this module -> dropped.
        # (Not valid if the BN were switched to eval-mode running stats.)

        # IIDBatchNorm3d affine parameters at fresh init (per field).
        self.gamma = jnp.ones((out_channels,), jnp.float32)
        self.beta = jnp.zeros((out_channels,), jnp.float32)

    def __call__(self, x_ncdhw, pool_kernel_size=(2, 2, 2), pool_padding=(0, 0, 0)):
        assert pool_kernel_size == (2, 2, 2) and pool_padding == (0, 0, 0)
        B, C, D, H, W = x_ncdhw.shape
        assert C == self.cin and D % 2 == 0 and H % 2 == 0 and W % 2 == 0
        Dp, Hp, Wp = D // 2, H // 2, W // 2

        # Single host-side swizzle (replaces the plain NCDHW->NDHWC transpose):
        # all three 2x pooling parities go to a major axis and (w, c) merge on
        # the lane axis -> lane-dense DMA and shuffle-free in-kernel pooling.
        x = x_ncdhw.astype(jnp.float32).reshape(B, self.cin, Dp, 2, Hp, 2, Wp, 2)
        x = jnp.transpose(x, (0, 3, 5, 7, 2, 4, 6, 1))    # (B,2d,2h,2w,Dp,Hp,Wp,Cin)
        x_in = x.reshape(B, 8, Dp, Hp, Wp * self.cin)

        w_toep = toeplitz_rhs_along_w(self.w_dhwio, Wp, self.pad)

        y, ssum, ssq = pool_conv_sums(
            x_in, w_toep, K=self.K, pad=self.pad,
            Dp=Dp, Hp=Hp, Wp=Wp, Cin=self.cin, Cout=self.cout)

        # IIDBatchNorm3d (training mode): per-field mean/var over batch, space
        # and the field's N group channels; biased variance.
        # TODO(synk): escnn applies the IID normalization in the irrep basis of
        # the regular repr and updates running stats; here per-field scalar
        # mean/var are applied directly in the group-channel basis.
        n = B * Dp * Hp * Wp * self.N
        sum_f = ssum.sum(axis=(0, 1)).reshape(Wp, self.out_fields, self.N).sum(axis=(0, 2))
        sq_f = ssq.sum(axis=(0, 1)).reshape(Wp, self.out_fields, self.N).sum(axis=(0, 2))
        mean_f = sum_f / n
        var_f = jnp.maximum(sq_f / n - mean_f * mean_f, 0.0)   # clamp cancellation
        inv_f = self.gamma / jnp.sqrt(var_f + self.eps)
        scale_c = jnp.repeat(inv_f, self.N)                        # (Cout,)
        shift_c = jnp.repeat(self.beta - mean_f * inv_f, self.N)   # (Cout,)
        # Per-channel -> per-lane of the flattened (w, c) minor dim.
        scale_l = jnp.tile(scale_c, Wp).reshape(1, Wp * self.cout)
        shift_l = jnp.tile(shift_c, Wp).reshape(1, Wp * self.cout)

        out = bn_relu(y, scale_l, shift_l)            # (B, Dp*Hp, Wp*Cout) f32
        out = out.reshape(B, Dp, Hp, Wp, self.cout)
        return jnp.transpose(out, (0, 4, 1, 2, 3))    # back to NCDHW


# ---------------------------------------------------------------------------
# Pure-JAX reference (same parameters / same bf16 operand + storage precision).
# ---------------------------------------------------------------------------
def reference(model, x_ncdhw):
    x = jnp.transpose(x_ncdhw, (0, 2, 3, 4, 1)).astype(jnp.float32)
    xp = lax.reduce_window(x, -jnp.inf, lax.max,
                           (1, 2, 2, 2, 1), (1, 2, 2, 2, 1), "VALID")
    p = model.pad
    y = lax.conv_general_dilated(
        xp.astype(jnp.bfloat16), model.w_dhwio.astype(jnp.bfloat16),
        window_strides=(1, 1, 1), padding=[(p, p)] * 3,
        dimension_numbers=("NDHWC", "DHWIO", "NDHWC"),
        preferred_element_type=jnp.float32)
    B, Dp, Hp, Wp, Cc = y.shape
    yf = y.reshape(B, Dp, Hp, Wp, model.out_fields, model.N)
    mean = yf.mean(axis=(0, 1, 2, 3, 5))                  # stats from f32
    var = yf.var(axis=(0, 1, 2, 3, 5))
    inv = model.gamma / jnp.sqrt(var + model.eps)
    # Normalization is applied to the bf16-rounded activations (as stored by K1).
    yq = y.astype(jnp.bfloat16).astype(jnp.float32).reshape(
        B, Dp, Hp, Wp, model.out_fields, model.N)
    yn = ((yq - mean[None, None, None, None, :, None])
          * inv[None, None, None, None, :, None]
          + model.beta[None, None, None, None, :, None])
    out = jnp.maximum(yn.reshape(B, Dp, Hp, Wp, Cc), 0.0)
    return jnp.transpose(out, (0, 4, 1, 2, 3))


if __name__ == "__main__":
    key = jax.random.PRNGKey(0)
    k_param, k_x = jax.random.split(key)

    # Small shapes: B=2, in/out fields=2, group order N=8 (Cin=Cout=16),
    # spatial 16^3 -> pooled 8^3, kernel_size=3.
    B, in_fields, out_fields, N, K = 2, 2, 2, 8, 3
    D = H = W = 16
    model = DownConvRot3d(in_fields, out_fields, K, N, k_param)
    x = jax.random.normal(k_x, (B, in_fields * N, D, H, W), jnp.float32)

    forward = jax.jit(model)
    out = jax.block_until_ready(forward(x))

    assert out.shape == (B, out_fields * N, D // 2, H // 2, W // 2), out.shape
    ref = reference(model, x)
    max_err = float(jnp.max(jnp.abs(out - ref)))
    assert max_err < 5e-3, f"mismatch vs reference: {max_err}"

    print("KERNEL_OK")
</pallas_src>

<mosaic_0001>
module attributes {stable_mosaic.version = 11 : i64} {
  func.func @_pool_conv_sums_kernel(%arg0: i32, %arg1: memref<1x8x8x8x128xf32, #tpu.memory_space<vmem>>, %arg2: memref<1152x128xbf16, #tpu.memory_space<vmem>>, %arg3: memref<1x64x128xbf16, #tpu.memory_space<vmem>>, %arg4: memref<1x1x128xf32, #tpu.memory_space<vmem>>, %arg5: memref<1x1x128xf32, #tpu.memory_space<vmem>>, %arg6: memref<10x10x128xf32, #tpu.memory_space<vmem>>, %arg7: memref<64x1152xbf16, #tpu.memory_space<vmem>>) attributes {dimension_semantics = [#tpu.dimension_semantics<parallel>], iteration_bounds = array<i64: 2>, scalar_prefetch = 0 : i64, scratch_operands = 2 : i64, tpu.core_type = #tpu.core_type<tc>, window_params = [{transform_indices = @transform_0, window_bounds = array<i64: 1, 8, 8, 8, 128>}, {pipeline_mode = #tpu.pipeline_mode<synchronous>, transform_indices = @transform_1, window_bounds = array<i64: 1152, 128>}, {transform_indices = @transform_2, window_bounds = array<i64: 1, 64, 128>}, {transform_indices = @transform_3, window_bounds = array<i64: 1, 1, 128>}, {transform_indices = @transform_4, window_bounds = array<i64: 1, 1, 128>}]} {
    %c0 = arith.constant 0 : index
    %c0_0 = arith.constant 0 : index
    %c0_1 = arith.constant 0 : index
    %c0_2 = arith.constant 0 : index
    %c0_3 = arith.constant 0 : index
    %0 = vector.load %arg1[%c0, %c0_0, %c0_1, %c0_2, %c0_3] : memref<1x8x8x8x128xf32, #tpu.memory_space<vmem>>, vector<1x1x8x8x128xf32>
    %1 = vector.shape_cast %0 : vector<1x1x8x8x128xf32> to vector<8x8x128xf32>
    %c0_4 = arith.constant 0 : index
    %c1 = arith.constant 1 : index
    %c0_5 = arith.constant 0 : index
    %c0_6 = arith.constant 0 : index
    %c0_7 = arith.constant 0 : index
    %2 = vector.load %arg1[%c0_4, %c1, %c0_5, %c0_6, %c0_7] : memref<1x8x8x8x128xf32, #tpu.memory_space<vmem>>, vector<1x1x8x8x128xf32>
    %3 = vector.shape_cast %2 : vector<1x1x8x8x128xf32> to vector<8x8x128xf32>
    %4 = arith.maximumf %1, %3 : vector<8x8x128xf32>
    %c0_8 = arith.constant 0 : index
    %c2 = arith.constant 2 : index
    %c0_9 = arith.constant 0 : index
    %c0_10 = arith.constant 0 : index
    %c0_11 = arith.constant 0 : index
    %5 = vector.load %arg1[%c0_8, %c2, %c0_9, %c0_10, %c0_11] : memref<1x8x8x8x128xf32, #tpu.memory_space<vmem>>, vector<1x1x8x8x128xf32>
    %6 = vector.shape_cast %5 : vector<1x1x8x8x128xf32> to vector<8x8x128xf32>
    %c0_12 = arith.constant 0 : index
    %c3 = arith.constant 3 : index
    %c0_13 = arith.constant 0 : index
    %c0_14 = arith.constant 0 : index
    %c0_15 = arith.constant 0 : index
    %7 = vector.load %arg1[%c0_12, %c3, %c0_13, %c0_14, %c0_15] : memref<1x8x8x8x128xf32, #tpu.memory_space<vmem>>, vector<1x1x8x8x128xf32>
    %8 = vector.shape_cast %7 : vector<1x1x8x8x128xf32> to vector<8x8x128xf32>
    %9 = arith.maximumf %6, %8 : vector<8x8x128xf32>
    %c0_16 = arith.constant 0 : index
    %c4 = arith.constant 4 : index
    %c0_17 = arith.constant 0 : index
    %c0_18 = arith.constant 0 : index
    %c0_19 = arith.constant 0 : index
    %10 = vector.load %arg1[%c0_16, %c4, %c0_17, %c0_18, %c0_19] : memref<1x8x8x8x128xf32, #tpu.memory_space<vmem>>, vector<1x1x8x8x128xf32>
    %11 = vector.shape_cast %10 : vector<1x1x8x8x128xf32> to vector<8x8x128xf32>
    %c0_20 = arith.constant 0 : index
    %c5 = arith.constant 5 : index
    %c0_21 = arith.constant 0 : index
    %c0_22 = arith.constant 0 : index
    %c0_23 = arith.constant 0 : index
    %12 = vector.load %arg1[%c0_20, %c5, %c0_21, %c0_22, %c0_23] : memref<1x8x8x8x128xf32, #tpu.memory_space<vmem>>, vector<1x1x8x8x128xf32>
    %13 = vector.shape_cast %12 : vector<1x1x8x8x128xf32> to vector<8x8x128xf32>
    %14 = arith.maximumf %11, %13 : vector<8x8x128xf32>
    %c0_24 = arith.constant 0 : index
    %c6 = arith.constant 6 : index
    %c0_25 = arith.constant 0 : index
    %c0_26 = arith.constant 0 : index
    %c0_27 = arith.constant 0 : index
    %15 = vector.load %arg1[%c0_24, %c6, %c0_25, %c0_26, %c0_27] : memref<1x8x8x8x128xf32, #tpu.memory_space<vmem>>, vector<1x1x8x8x128xf32>
    %16 = vector.shape_cast %15 : vector<1x1x8x8x128xf32> to vector<8x8x128xf32>
    %c0_28 = arith.constant 0 : index
    %c7 = arith.constant 7 : index
    %c0_29 = arith.constant 0 : index
    %c0_30 = arith.constant 0 : index
    %c0_31 = arith.constant 0 : index
    %17 = vector.load %arg1[%c0_28, %c7, %c0_29, %c0_30, %c0_31] : memref<1x8x8x8x128xf32, #tpu.memory_space<vmem>>, vector<1x1x8x8x128xf32>
    %18 = vector.shape_cast %17 : vector<1x1x8x8x128xf32> to vector<8x8x128xf32>
    %19 = arith.maximumf %16, %18 : vector<8x8x128xf32>
    %20 = arith.maximumf %4, %9 : vector<8x8x128xf32>
    %21 = arith.maximumf %14, %19 : vector<8x8x128xf32>
    %22 = arith.maximumf %20, %21 : vector<8x8x128xf32>
    %cst = arith.constant 0.000000e+00 : f32
    %23 = vector.broadcast %cst : f32 to vector<1x10x128xf32>
    %c0_32 = arith.constant 0 : index
    %c0_33 = arith.constant 0 : index
    %c0_34 = arith.constant 0 : index
    %24 = vector.load %arg6[%c0_32, %c0_33, %c0_34] : memref<10x10x128xf32, #tpu.memory_space<vmem>>, vector<1x10x128xf32>
    tpu.vector_store %arg6[%c0_32, %c0_33, %c0_34], %23 {strides = array<i32>} : memref<10x10x128xf32, #tpu.memory_space<vmem>>, vector<1x10x128xf32>,
    %c9 = arith.constant 9 : index
    %c0_35 = arith.constant 0 : index
    %c0_36 = arith.constant 0 : index
    %25 = vector.load %arg6[%c9, %c0_35, %c0_36] : memref<10x10x128xf32, #tpu.memory_space<vmem>>, vector<1x10x128xf32>
    tpu.vector_store %arg6[%c9, %c0_35, %c0_36], %23 {strides = array<i32>} : memref<10x10x128xf32, #tpu.memory_space<vmem>>, vector<1x10x128xf32>,
    %cst_37 = arith.constant 0.000000e+00 : f32
    %26 = vector.broadcast %cst_37 : f32 to vector<8x1x128xf32>
    %c1_38 = arith.constant 1 : index
    %c0_39 = arith.constant 0 : index
    %c0_40 = arith.constant 0 : index
    %27 = vector.load %arg6[%c1_38, %c0_39, %c0_40] : memref<10x10x128xf32, #tpu.memory_space<vmem>>, vector<8x1x128xf32>
    tpu.vector_store %arg6[%c1_38, %c0_39, %c0_40], %26 {strides = array<i32>} : memref<10x10x128xf32, #tpu.memory_space<vmem>>, vector<8x1x128xf32>,
    %c1_41 = arith.constant 1 : index
    %c9_42 = arith.constant 9 : index
    %c0_43 = arith.constant 0 : index
    %28 = vector.load %arg6[%c1_41, %c9_42, %c0_43] : memref<10x10x128xf32, #tpu.memory_space<vmem>>, vector<8x1x128xf32>
    tpu.vector_store %arg6[%c1_41, %c9_42, %c0_43], %26 {strides = array<i32>} : memref<10x10x128xf32, #tpu.memory_space<vmem>>, vector<8x1x128xf32>,
    %c1_44 = arith.constant 1 : index
    %c1_45 = arith.constant 1 : index
    %c0_46 = arith.constant 0 : index
    %29 = vector.load %arg6[%c1_44, %c1_45, %c0_46] : memref<10x10x128xf32, #tpu.memory_space<vmem>>, vector<8x8x128xf32>
    tpu.vector_store %arg6[%c1_44, %c1_45, %c0_46], %22 {strides = array<i32>} : memref<10x10x128xf32, #tpu.memory_space<vmem>>, vector<8x8x128xf32>,
    %c0_47 = arith.constant 0 : index
    %c0_48 = arith.constant 0 : index
    %c0_49 = arith.constant 0 : index
    %30 = vector.load %arg6[%c0_47, %c0_48, %c0_49] : memref<10x10x128xf32, #tpu.memory_space<vmem>>, vector<8x8x128xf32>
    %31 = vector.shape_cast %30 : vector<8x8x128xf32> to vector<64x128xf32>
    %32 = arith.truncf %31 : vector<64x128xf32> to vector<64x128xbf16>
    %c0_50 = arith.constant 0 : index
    %c0_51 = arith.constant 0 : index
    %33 = vector.load %arg7[%c0_50, %c0_51] : memref<64x1152xbf16, #tpu.memory_space<vmem>>, vector<64x128xbf16>
    tpu.vector_store %arg7[%c0_50, %c0_51], %32 {strides = array<i32>} : memref<64x1152xbf16, #tpu.memory_space<vmem>>, vector<64x128xbf16>,
    %c0_52 = arith.constant 0 : index
    %c1_53 = arith.constant 1 : index
    %c0_54 = arith.constant 0 : index
    %34 = vector.load %arg6[%c0_52, %c1_53, %c0_54] : memref<10x10x128xf32, #tpu.memory_space<vmem>>, vector<8x8x128xf32>
    %35 = vector.shape_cast %34 : vector<8x8x128xf32> to vector<64x128xf32>
    %36 = arith.truncf %35 : vector<64x128xf32> to vector<64x128xbf16>
    %c0_55 = arith.constant 0 : index
    %c128 = arith.constant 128 : index
    %37 = vector.load %arg7[%c0_55, %c128] : memref<64x1152xbf16, #tpu.memory_space<vmem>>, vector<64x128xbf16>
    tpu.vector_store %arg7[%c0_55, %c128], %36 {strides = array<i32>} : memref<64x1152xbf16, #tpu.memory_space<vmem>>, vector<64x128xbf16>,
    %c0_56 = arith.constant 0 : index
    %c2_57 = arith.constant 2 : index
    %c0_58 = arith.constant 0 : index
    %38 = vector.load %arg6[%c0_56, %c2_57, %c0_58] : memref<10x10x128xf32, #tpu.memory_space<vmem>>, vector<8x8x128xf32>
    %39 = vector.shape_cast %38 : vector<8x8x128xf32> to vector<64x128xf32>
    %40 = arith.truncf %39 : vector<64x128xf32> to vector<64x128xbf16>
    %c0_59 = arith.constant 0 : index
    %c256 = arith.constant 256 : index
    %41 = vector.load %arg7[%c0_59, %c256] : memref<64x1152xbf16, #tpu.memory_space<vmem>>, vector<64x128xbf16>
    tpu.vector_store %arg7[%c0_59, %c256], %40 {strides = array<i32>} : memref<64x1152xbf16, #tpu.memory_space<vmem>>, vector<64x128xbf16>,
    %c1_60 = arith.constant 1 : index
    %c0_61 = arith.constant 0 : index
    %c0_62 = arith.constant 0 : index
    %42 = vector.load %arg6[%c1_60, %c0_61, %c0_62] : memref<10x10x128xf32, #tpu.memory_space<vmem>>, vector<8x8x128xf32>
    %43 = vector.shape_cast %42 : vector<8x8x128xf32> to vector<64x128xf32>
    %44 = arith.truncf %43 : vector<64x128xf32> to vector<64x128xbf16>
    %c0_63 = arith.constant 0 : index
    %c384 = arith.constant 384 : index
    %45 = vector.load %arg7[%c0_63, %c384] : memref<64x1152xbf16, #tpu.memory_space<vmem>>, vector<64x128xbf16>
    tpu.vector_store %arg7[%c0_63, %c384], %44 {strides = array<i32>} : memref<64x1152xbf16, #tpu.memory_space<vmem>>, vector<64x128xbf16>,
    %c1_64 = arith.constant 1 : index
    %c1_65 = arith.constant 1 : index
    %c0_66 = arith.constant 0 : index
    %46 = vector.load %arg6[%c1_64, %c1_65, %c0_66] : memref<10x10x128xf32, #tpu.memory_space<vmem>>, vector<8x8x128xf32>
    %47 = vector.shape_cast %46 : vector<8x8x128xf32> to vector<64x128xf32>
    %48 = arith.truncf %47 : vector<64x128xf32> to vector<64x128xbf16>
    %c0_67 = arith.constant 0 : index
    %c512 = arith.constant 512 : index
    %49 = vector.load %arg7[%c0_67, %c512] : memref<64x1152xbf16, #tpu.memory_space<vmem>>, vector<64x128xbf16>
    tpu.vector_store %arg7[%c0_67, %c512], %48 {strides = array<i32>} : memref<64x1152xbf16, #tpu.memory_space<vmem>>, vector<64x128xbf16>,
    %c1_68 = arith.constant 1 : index
    %c2_69 = arith.constant 2 : index
    %c0_70 = arith.constant 0 : index
    %50 = vector.load %arg6[%c1_68, %c2_69, %c0_70] : memref<10x10x128xf32, #tpu.memory_space<vmem>>, vector<8x8x128xf32>
    %51 = vector.shape_cast %50 : vector<8x8x128xf32> to vector<64x128xf32>
    %52 = arith.truncf %51 : vector<64x128xf32> to vector<64x128xbf16>
    %c0_71 = arith.constant 0 : index
    %c640 = arith.constant 640 : index
    %53 = vector.load %arg7[%c0_71, %c640] : memref<64x1152xbf16, #tpu.memory_space<vmem>>, vector<64x128xbf16>
    tpu.vector_store %arg7[%c0_71, %c640], %52 {strides = array<i32>} : memref<64x1152xbf16, #tpu.memory_space<vmem>>, vector<64x128xbf16>,
    %c2_72 = arith.constant 2 : index
    %c0_73 = arith.constant 0 : index
    %c0_74 = arith.constant 0 : index
    %54 = vector.load %arg6[%c2_72, %c0_73, %c0_74] : memref<10x10x128xf32, #tpu.memory_space<vmem>>, vector<8x8x128xf32>
    %55 = vector.shape_cast %54 : vector<8x8x128xf32> to vector<64x128xf32>
    %56 = arith.truncf %55 : vector<64x128xf32> to vector<64x128xbf16>
    %c0_75 = arith.constant 0 : index
    %c768 = arith.constant 768 : index
    %57 = vector.load %arg7[%c0_75, %c768] : memref<64x1152xbf16, #tpu.memory_space<vmem>>, vector<64x128xbf16>
    tpu.vector_store %arg7[%c0_75, %c768], %56 {strides = array<i32>} : memref<64x1152xbf16, #tpu.memory_space<vmem>>, vector<64x128xbf16>,
    %c2_76 = arith.constant 2 : index
    %c1_77 = arith.constant 1 : index
    %c0_78 = arith.constant 0 : index
    %58 = vector.load %arg6[%c2_76, %c1_77, %c0_78] : memref<10x10x128xf32, #tpu.memory_space<vmem>>, vector<8x8x128xf32>
    %59 = vector.shape_cast %58 : vector<8x8x128xf32> to vector<64x128xf32>
    %60 = arith.truncf %59 : vector<64x128xf32> to vector<64x128xbf16>
    %c0_79 = arith.constant 0 : index
    %c896 = arith.constant 896 : index
    %61 = vector.load %arg7[%c0_79, %c896] : memref<64x1152xbf16, #tpu.memory_space<vmem>>, vector<64x128xbf16>
    tpu.vector_store %arg7[%c0_79, %c896], %60 {strides = array<i32>} : memref<64x1152xbf16, #tpu.memory_space<vmem>>, vector<64x128xbf16>,
    %c2_80 = arith.constant 2 : index
    %c2_81 = arith.constant 2 : index
    %c0_82 = arith.constant 0 : index
    %62 = vector.load %arg6[%c2_80, %c2_81, %c0_82] : memref<10x10x128xf32, #tpu.memory_space<vmem>>, vector<8x8x128xf32>
    %63 = vector.shape_cast %62 : vector<8x8x128xf32> to vector<64x128xf32>
    %64 = arith.truncf %63 : vector<64x128xf32> to vector<64x128xbf16>
    %c0_83 = arith.constant 0 : index
    %c1024 = arith.constant 1024 : index
    %65 = vector.load %arg7[%c0_83, %c1024] : memref<64x1152xbf16, #tpu.memory_space<vmem>>, vector<64x128xbf16>
    tpu.vector_store %arg7[%c0_83, %c1024], %64 {strides = array<i32>} : memref<64x1152xbf16, #tpu.memory_space<vmem>>, vector<64x128xbf16>,
    %c0_84 = arith.constant 0 : index
    %c0_85 = arith.constant 0 : index
    %66 = vector.load %arg7[%c0_84, %c0_85] : memref<64x1152xbf16, #tpu.memory_space<vmem>>, vector<64x1152xbf16>
    %c0_86 = arith.constant 0 : index
    %c0_87 = arith.constant 0 : index
    %67 = vector.load %arg2[%c0_86, %c0_87] : memref<1152x128xbf16, #tpu.memory_space<vmem>>, vector<1152x128xbf16>
    %cst_88 = arith.constant dense<0.000000e+00> : vector<64x128xf32>
    %68 = tpu.matmul %66, %67, %cst_88 {dimension_numbers = #tpu.dot_dimension_numbers<[1], [0], [0], [1], [0, 0, 1, 1], [], []>} : vector<64x1152xbf16>, vector<1152x128xbf16>, vector<64x128xf32> -> vector<64x128xf32>
    %cst_89 = arith.constant dense<0.000000e+00> : vector<128xf32>
    %69 = vector.multi_reduction <add>, %68, %cst_89 [0] : vector<64x128xf32> to vector<128xf32>
    %70 = vector.shape_cast %69 : vector<128xf32> to vector<1x128xf32>
    %c0_90 = arith.constant 0 : index
    %c0_91 = arith.constant 0 : index
    %c0_92 = arith.constant 0 : index
    %71 = vector.load %arg4[%c0_90, %c0_91, %c0_92] : memref<1x1x128xf32, #tpu.memory_space<vmem>>, vector<1x1x128xf32>
    %72 = vector.shape_cast %71 : vector<1x1x128xf32> to vector<1x128xf32>
    %73 = vector.shape_cast %70 : vector<1x128xf32> to vector<1x1x128xf32>
    tpu.vector_store %arg4[%c0_90, %c0_91, %c0_92], %73 {strides = array<i32>} : memref<1x1x128xf32, #tpu.memory_space<vmem>>, vector<1x1x128xf32>,
    %74 = arith.mulf %68, %68 : vector<64x128xf32>
    %cst_93 = arith.constant dense<0.000000e+00> : vector<128xf32>
    %75 = vector.multi_reduction <add>, %74, %cst_93 [0] : vector<64x128xf32> to vector<128xf32>
    %76 = vector.shape_cast %75 : vector<128xf32> to vector<1x128xf32>
    %c0_94 = arith.constant 0 : index
    %c0_95 = arith.constant 0 : index
    %c0_96 = arith.constant 0 : index
    %77 = vector.load %arg5[%c0_94, %c0_95, %c0_96] : memref<1x1x128xf32, #tpu.memory_space<vmem>>, vector<1x1x128xf32>
    %78 = vector.shape_cast %77 : vector<1x1x128xf32> to vector<1x128xf32>
    %79 = vector.shape_cast %76 : vector<1x128xf32> to vector<1x1x128xf32>
    tpu.vector_store %arg5[%c0_94, %c0_95, %c0_96], %79 {strides = array<i32>} : memref<1x1x128xf32, #tpu.memory_space<vmem>>, vector<1x1x128xf32>,
    %80 = arith.truncf %68 : vector<64x128xf32> to vector<64x128xbf16>
    %c0_97 = arith.constant 0 : index
    %c0_98 = arith.constant 0 : index
    %c0_99 = arith.constant 0 : index
    %81 = vector.load %arg3[%c0_97, %c0_98, %c0_99] : memref<1x64x128xbf16, #tpu.memory_space<vmem>>, vector<1x64x128xbf16>
    %82 = vector.shape_cast %81 : vector<1x64x128xbf16> to vector<64x128xbf16>
    %83 = vector.shape_cast %80 : vector<64x128xbf16> to vector<1x64x128xbf16>
    tpu.vector_store %arg3[%c0_97, %c0_98, %c0_99], %83 {strides = array<i32>} : memref<1x64x128xbf16, #tpu.memory_space<vmem>>, vector<1x64x128xbf16>,
    return
  }
  func.func @transform_0(%arg0: i32) -> (i32, i32, i32, i32, i32) {
    %c0_i32 = arith.constant 0 : i32
    %c0_i32_0 = arith.constant 0 : i32
    %c0_i32_1 = arith.constant 0 : i32
    %c0_i32_2 = arith.constant 0 : i32
    %c0_i32_3 = arith.constant 0 : i32
    return %arg0, %c0_i32, %c0_i32_0, %c0_i32_1, %c0_i32_2 : i32, i32, i32, i32, i32
  }
  func.func @transform_1(%arg0: i32) -> (i32, i32) {
    %c0_i32 = arith.constant 0 : i32
    %c0_i32_0 = arith.constant 0 : i32
    %c0_i32_1 = arith.constant 0 : i32
    return %c0_i32, %c0_i32_0 : i32, i32
  }
  func.func @transform_2(%arg0: i32) -> (i32, i32, i32) {
    %c0_i32 = arith.constant 0 : i32
    %c0_i32_0 = arith.constant 0 : i32
    %c0_i32_1 = arith.constant 0 : i32
    return %arg0, %c0_i32, %c0_i32_0 : i32, i32, i32
  }
  func.func @transform_3(%arg0: i32) -> (i32, i32, i32) {
    %c0_i32 = arith.constant 0 : i32
    %c0_i32_0 = arith.constant 0 : i32
    %c0_i32_1 = arith.constant 0 : i32
    return %arg0, %c0_i32, %c0_i32_0 : i32, i32, i32
  }
  func.func @transform_4(%arg0: i32) -> (i32, i32, i32) {
    %c0_i32 = arith.constant 0 : i32
    %c0_i32_0 = arith.constant 0 : i32
    %c0_i32_1 = arith.constant 0 : i32
    return %arg0, %c0_i32, %c0_i32_0 : i32, i32, i32
  }
}

module attributes {stable_mosaic.version = 11 : i64} {
  func.func @_bn_relu_kernel(%arg0: i32, %arg1: i32, %arg2: memref<1x64x128xbf16, #tpu.memory_space<vmem>>, %arg3: memref<1x128xf32, #tpu.memory_space<vmem>>, %arg4: memref<1x128xf32, #tpu.memory_space<vmem>>, %arg5: memref<1x64x128xf32, #tpu.memory_space<vmem>>) attributes {dimension_semantics = [#tpu.dimension_semantics<parallel>, #tpu.dimension_semantics<parallel>], iteration_bounds = array<i64: 2, 1>, scalar_prefetch = 0 : i64, scratch_operands = 0 : i64, tpu.core_type = #tpu.core_type<tc>, window_params = [{transform_indices = @transform_0, window_bounds = array<i64: 1, 64, 128>}, {pipeline_mode = #tpu.pipeline_mode<synchronous>, transform_indices = @transform_1, window_bounds = array<i64: 1, 128>}, {pipeline_mode = #tpu.pipeline_mode<synchronous>, transform_indices = @transform_2, window_bounds = array<i64: 1, 128>}, {transform_indices = @transform_3, window_bounds = array<i64: 1, 64, 128>}]} {
    %c0 = arith.constant 0 : index
    %c0_0 = arith.constant 0 : index
    %c0_1 = arith.constant 0 : index
    %0 = vector.load %arg2[%c0, %c0_0, %c0_1] : memref<1x64x128xbf16, #tpu.memory_space<vmem>>, vector<1x64x128xbf16>
    %1 = vector.shape_cast %0 : vector<1x64x128xbf16> to vector<64x128xbf16>
    %2 = arith.extf %1 : vector<64x128xbf16> to vector<64x128xf32>
    %c0_2 = arith.constant 0 : index
    %c0_3 = arith.constant 0 : index
    %3 = vector.load %arg3[%c0_2, %c0_3] : memref<1x128xf32, #tpu.memory_space<vmem>>, vector<1x128xf32>
    %4 = vector.broadcast %3 : vector<1x128xf32> to vector<64x128xf32>
    %5 = arith.mulf %2, %4 : vector<64x128xf32>
    %c0_4 = arith.constant 0 : index
    %c0_5 = arith.constant 0 : index
    %6 = vector.load %arg4[%c0_4, %c0_5] : memref<1x128xf32, #tpu.memory_space<vmem>>, vector<1x128xf32>
    %7 = vector.broadcast %6 : vector<1x128xf32> to vector<64x128xf32>
    %8 = arith.addf %5, %7 : vector<64x128xf32>
    %cst = arith.constant 0.000000e+00 : f32
    %9 = vector.broadcast %cst : f32 to vector<64x128xf32>
    %10 = arith.maximumf %8, %9 : vector<64x128xf32>
    %c0_6 = arith.constant 0 : index
    %c0_7 = arith.constant 0 : index
    %c0_8 = arith.constant 0 : index
    %11 = vector.load %arg5[%c0_6, %c0_7, %c0_8] : memref<1x64x128xf32, #tpu.memory_space<vmem>>, vector<1x64x128xf32>
    %12 = vector.shape_cast %11 : vector<1x64x128xf32> to vector<64x128xf32>
    %13 = vector.shape_cast %10 : vector<64x128xf32> to vector<1x64x128xf32>
    tpu.vector_store %arg5[%c0_6, %c0_7, %c0_8], %13 {strides = array<i32>} : memref<1x64x128xf32, #tpu.memory_space<vmem>>, vector<1x64x128xf32>,
    return
  }
  func.func @transform_0(%arg0: i32, %arg1: i32) -> (i32, i32, i32) {
    %c0_i32 = arith.constant 0 : i32
    %c0_i32_0 = arith.constant 0 : i32
    return %arg0, %arg1, %c0_i32 : i32, i32, i32
  }
  func.func @transform_1(%arg0: i32, %arg1: i32) -> (i32, i32) {
    %c0_i32 = arith.constant 0 : i32
    %c0_i32_0 = arith.constant 0 : i32
    %c0_i32_1 = arith.constant 0 : i32
    return %c0_i32, %c0_i32_0 : i32, i32
  }
  func.func @transform_2(%arg0: i32, %arg1: i32) -> (i32, i32) {
    %c0_i32 = arith.constant 0 : i32
    %c0_i32_0 = arith.constant 0 : i32
    %c0_i32_1 = arith.constant 0 : i32
    return %c0_i32, %c0_i32_0 : i32, i32
  }
  func.func @transform_3(%arg0: i32, %arg1: i32) -> (i32, i32, i32) {
    %c0_i32 = arith.constant 0 : i32
    %c0_i32_0 = arith.constant 0 : i32
    return %arg0, %arg1, %c0_i32 : i32, i32, i32
  }
}

</mosaic_0001>

<llo_original>
// kernel: tile.9
$region0: #{tile.9}
  %s0 = inlined_call_operand.vmem [shape: f32[2,8], index: 0, kind: input, shape index: {}]
  %s1 = inlined_call_operand.vmem [shape: f32[16], index: 1, kind: output, shape index: {}]
  $region1: #{tile.9} parent=0
    #allocation0 [shape = 'u8[4096]{0}', space=vmem, size = 0x1000, scoped, tag = 'scoped mem for output reshape']
    #allocation1 [shape = 'u8[4096]{0}', space=vmem, size = 0x1000, scoped, tag = 'scoped mem for input reshape']
    %s3 = sshll.u32 1, 2
    %s4 = ssub.s32 %s3, 1
    %v5 = vld [vmem:[%s0] sm:%s4]
    %6 = vst [vmem:[#allocation1] sm:%s4] %v5
    %v7 = vld [vmem:[#allocation1] sm:$0x1]
    %vm8 = vcmask 64512
    %9 = vst.msk [vmem:[#allocation0] sm:$0x1] %vm8, %v7
    %s10 = scalar_lea.vmem [#allocation1], 1
    %v11 = vld [vmem:[%s10] sm:$0x1]
    %12 = vrot.lane.b32.xlu0 %v11, 8
    %v13 = vpop.permute.xlu0 %12
    %vm14 = vcmask 130112
    %15 = vst.msk [vmem:[#allocation0] sm:$0x1] %vm14, %v13
    %s17 = sshll.u32 1, 1
    %s18 = ssub.s32 %s17, 1
    %v20 = vld [vmem:[#allocation0] sm:%s18]
    %s21 = sshll.u32 1, 1
    %s22 = ssub.s32 %s21, 1
    %23 = vst [vmem:[%s1] sm:%s22] %v20

// kernel: tile.10
$region0: #{tile.10}
  #allocation0 [shape = 's32[1]{0}', space=sflag, size = 0x4, scoped, tag = 'scoped memory for tile.10']
  %s0 = inlined_call_operand.vmem [shape: f32[16], index: 0, kind: input, shape index: {}]
  %s1 = inlined_call_operand.vmem [shape: f32[8,16], index: 1, kind: output, shape index: {}]
  // Predicated region
  $region2: #{tile.10} parent=0 // pred_check
    _
  $region3: #{tile.10} parent=0 // pred_check_branch
    %3 = sbr.rel (0) target = $region5
  $region4: #{tile.10} parent=0 // pred_region
    _
  $region5: #{tile.10} parent=0 // pred_fallthru
    _
  %v4 = vld [vmem:[%s0] ss:$0 sm:$0xff]
  %5 = vst [vmem:[%s1] sm:$0xff] %v4

// kernel: tile.11
$region0: #{tile.11}
  %s0 = inlined_call_operand.vmem [shape: f32[8,16], index: 0, kind: input, shape index: {}]
  %s1 = inlined_call_operand.vmem [shape: f32[1,128], index: 1, kind: output, shape index: {}]
  $region1: #{tile.11} parent=0
    #allocation0 [shape = 'u8[4096]{0}', space=vmem, size = 0x1000, scoped, tag = 'scoped mem for output reshape']
    %v2 = vld [vmem:[%s0] sm:$0x1]
    %vm3 = vcmask 130048
    %4 = vst.msk [vmem:[#allocation0] sm:$0x1] %vm3, %v2
    %s5 = scalar_lea.vmem %s0, 7
    %v6 = vld [vmem:[%s5] sm:$0x1]
    %7 = vrot.lane.b32.xlu0 %v6, 112
    %v8 = vpop.permute.xlu0 %7
    %vm9 = vcmask 1048448
    %10 = vst.msk [vmem:[#allocation0] sm:$0x1] %vm9, %v8
    %s11 = scalar_lea.vmem %s0, 6
    %v12 = vld [vmem:[%s11] sm:$0x1]
    %13 = vrot.lane.b32.xlu0 %v12, 96
    %v14 = vpop.permute.xlu0 %13
    %vm15 = vcmask 917248
    %16 = vst.msk [vmem:[#allocation0] sm:$0x1] %vm15, %v14
    %s17 = scalar_lea.vmem %s0, 5
    %v18 = vld [vmem:[%s17] sm:$0x1]
    %19 = vrot.lane.b32.xlu0 %v18, 80
    %v20 = vpop.permute.xlu0 %19
    %vm21 = vcmask 786048
    %22 = vst.msk [vmem:[#allocation0] sm:$0x1] %vm21, %v20
    %s23 = scalar_lea.vmem %s0, 4
    %v24 = vld [vmem:[%s23] sm:$0x1]
    %25 = vrot.lane.b32.xlu0 %v24, 64
    %v26 = vpop.permute.xlu0 %25
    %vm27 = vcmask 654848
    %28 = vst.msk [vmem:[#allocation0] sm:$0x1] %vm27, %v26
    %s29 = scalar_lea.vmem %s0, 3
    %v30 = vld [vmem:[%s29] sm:$0x1]
    %31 = vrot.lane.b32.xlu0 %v30, 48
    %v32 = vpop.permute.xlu0 %31
    %vm33 = vcmask 523648
    %34 = vst.msk [vmem:[#allocation0] sm:$0x1] %vm33, %v32
    %s35 = scalar_lea.vmem %s0, 2
    %v36 = vld [vmem:[%s35] sm:$0x1]
    %37 = vrot.lane.b32.xlu0 %v36, 32
    %v38 = vpop.permute.xlu0 %37
    %vm39 = vcmask 392448
    %40 = vst.msk [vmem:[#allocation0] sm:$0x1] %vm39, %v38
    %s41 = scalar_lea.vmem %s0, 1
    %v42 = vld [vmem:[%s41] sm:$0x1]
    %43 = vrot.lane.b32.xlu0 %v42, 16
    %v44 = vpop.permute.xlu0 %43
    %vm45 = vcmask 261248
    %46 = vst.msk [vmem:[#allocation0] sm:$0x1] %vm45, %v44
    %s48 = sshll.u32 1, 1
    %s49 = ssub.s32 %s48, 1
    %v51 = vld [vmem:[#allocation0] sm:%s49]
    %s52 = sshll.u32 1, 1
    %s53 = ssub.s32 %s52, 1
    %54 = vst [vmem:[%s1] sm:%s53] %v51

// kernel: _unnamed_function_.2
$region0: #{_unnamed_function_.2}
  #allocation0 [shape = 'u32[]', space=smem, size = 0x4, offset = 0x4, fixed_abs, tag = 'smem constant byte address 0x4 - core index']
  #allocation1 [shape = 'u32[144,128]{1,0:T(1,128)}', space=vmem, size = 0x12000, scoped, tag = 'internal scratch']
  #allocation2 [shape = 'f32[10,10,128]{2,1,0:T(8,128)}', space=vmem, size = 0x14000, scoped, tag = 'scratch operand']
  #allocation3 [shape = 'bf16[64,1152]{1,0:T(8,128)(2,1)}', space=vmem, size = 0x24000, scoped, tag = 'scratch operand']
  %s0 = inlined_call_operand.vmem [shape: f32[2,8,8,8,128], index: 0, kind: input, shape index: {}]
  %s1 = inlined_call_operand.vmem [shape: bf16[1152,128], index: 1, kind: input, shape index: {}]
  %s2 = inlined_call_operand.vmem [shape: bf16[2,64,128], index: 2, kind: output, shape index: {0}]
  %s3 = inlined_call_operand.vmem [shape: f32[2,1,128], index: 3, kind: output, shape index: {1}]
  %s4 = inlined_call_operand.vmem [shape: f32[2,1,128], index: 4, kind: output, shape index: {2}]
  %5 = xla_tuple %s2, %s3, %s4
  %s6 = sld [smem:[#allocation0]]
  $region57: #{_unnamed_function_.2} parent=0
    _
  %s8 = ssub.s32 1, %s6
  %s9 = scalar_select 0, %s8, %s6
  loop: start=0, step=1, limit=4
  $region2: #{_unnamed_function_.2} parent=0 // loop_pre_header
    _
  $region3: #{_unnamed_function_.2} parent=0 // loop_header
    %s11 = sphi 0, %s15
    %p12 = scmp.ge.s32.totalorder %s11, 4
    %s21 = sphi 0, %s23
    %s24 = sphi 0, %s21
    %s25 = sphi 0, %s24
    %s41 = sphi 0, %s25
    %s45 = sphi 0, %s45
    %s47 = sphi 0, %s45
    %s48 = sphi 0, %s47
    %s62 = sphi 0, %s48
    %s68 = sphi 0, %s70
    %s71 = sphi 0, %s68
    %s72 = sphi 0, %s71
    %s88 = sphi 0, %s72
    %s94 = sphi 0, %s96
    %s97 = sphi 0, %s94
    %s98 = sphi 0, %s97
    %s114 = sphi 0, %s98
    %s120 = sphi 0, %s122
    %s123 = sphi 0, %s120
    %s124 = sphi 0, %s123
    %s140 = sphi 0, %s124
  $region4: #{_unnamed_function_.2} parent=0 // loop_header_branch
    %14 = sbr.rel (%p12) target = $region8
  $region5: #{_unnamed_function_.2} parent=0 // loop_body
    %s16 = ssub.s32 %s11, 1
    %s17 = ssub.s32 %s11, 2
    %s18 = sadd.s32 %s11, 1
    %s19 = ssub.s32 %s11, %s18
    %p20 = scmp.eq.s32.totalorder %s19, 0
    %s22 = sadd.s32 %s21, 1
    %s23 = scalar_select %p20, %s21, %s22
    %p26 = pneg %p20
    %p27 = scmp.eq.s32.totalorder %s11, 1
    %p28 = por %p26, %p27
    %p29 = scmp.ne.s32.totalorder %s21, %s24
    %p30 = scmp.eq.s32.totalorder %s11, 0
    %p31 = por %p29, %p30
    %p32 = scmp.ne.s32.totalorder %s21, %s24
    %p33 = scmp.eq.s32.totalorder %s16, 1
    %p34 = por %p32, %p33
    %p35 = scmp.ne.s32.totalorder %s24, %s25
    %p36 = scmp.eq.s32.totalorder %s16, 0
    %p37 = por %p35, %p36
    %p38 = scmp.ne.s32.totalorder %s24, %s25
    %p39 = scmp.eq.s32.totalorder %s17, 1
    %p40 = por %p38, %p39
    %p42 = scmp.ne.s32.totalorder %s25, %s41
    %p43 = scmp.eq.s32.totalorder %s17, 0
    %p44 = por %p42, %p43
    %s46 = sadd.s32 %s45, 1
    %p49 = scmp.eq.s32.totalorder %s11, 1
    %p50 = scmp.ne.s32.totalorder %s45, %s47
    %p51 = scmp.eq.s32.totalorder %s11, 0
    %p52 = por %p50, %p51
    %p53 = scmp.ne.s32.totalorder %s45, %s47
    %p54 = scmp.eq.s32.totalorder %s16, 1
    %p55 = por %p53, %p54
    %p56 = scmp.ne.s32.totalorder %s47, %s48
    %p57 = scmp.eq.s32.totalorder %s16, 0
    %p58 = por %p56, %p57
    %p59 = scmp.ne.s32.totalorder %s47, %s48
    %p60 = scmp.eq.s32.totalorder %s17, 1
    %p61 = por %p59, %p60
    %p63 = scmp.ne.s32.totalorder %s48, %s62
    %p64 = scmp.eq.s32.totalorder %s17, 0
    %p65 = por %p63, %p64
    %s66 = ssub.s32 %s11, %s18
    %p67 = scmp.eq.s32.totalorder %s66, 0
    %s69 = sadd.s32 %s68, 1
    %s70 = scalar_select %p67, %s68, %s69
    %p73 = pneg %p67
    %p74 = scmp.eq.s32.totalorder %s11, 1
    %p75 = por %p73, %p74
    %p76 = scmp.ne.s32.totalorder %s68, %s71
    %p77 = scmp.eq.s32.totalorder %s11, 0
    %p78 = por %p76, %p77
    %p79 = scmp.ne.s32.totalorder %s68, %s71
    %p80 = scmp.eq.s32.totalorder %s16, 1
    %p81 = por %p79, %p80
    %p82 = scmp.ne.s32.totalorder %s71, %s72
    %p83 = scmp.eq.s32.totalorder %s16, 0
    %p84 = por %p82, %p83
    %p85 = scmp.ne.s32.totalorder %s71, %s72
    %p86 = scmp.eq.s32.totalorder %s17, 1
    %p87 = por %p85, %p86
    %p89 = scmp.ne.s32.totalorder %s72, %s88
    %p90 = scmp.eq.s32.totalorder %s17, 0
    %p91 = por %p89, %p90
    %s92 = ssub.s32 %s11, %s18
    %p93 = scmp.eq.s32.totalorder %s92, 0
    %s95 = sadd.s32 %s94, 1
    %s96 = scalar_select %p93, %s94, %s95
    %p99 = pneg %p93
    %p100 = scmp.eq.s32.totalorder %s11, 1
    %p101 = por %p99, %p100
    %p102 = scmp.ne.s32.totalorder %s94, %s97
    %p103 = scmp.eq.s32.totalorder %s11, 0
    %p104 = por %p102, %p103
    %p105 = scmp.ne.s32.totalorder %s94, %s97
    %p106 = scmp.eq.s32.totalorder %s16, 1
    %p107 = por %p105, %p106
    %p108 = scmp.ne.s32.totalorder %s97, %s98
    %p109 = scmp.eq.s32.totalorder %s16, 0
    %p110 = por %p108, %p109
    %p111 = scmp.ne.s32.totalorder %s97, %s98
    %p112 = scmp.eq.s32.totalorder %s17, 1
    %p113 = por %p111, %p112
    %p115 = scmp.ne.s32.totalorder %s98, %s114
    %p116 = scmp.eq.s32.totalorder %s17, 0
    %p117 = por %p115, %p116
    %s118 = ssub.s32 %s11, %s18
    %p119 = scmp.eq.s32.totalorder %s118, 0
    %s121 = sadd.s32 %s120, 1
    %s122 = scalar_select %p119, %s120, %s121
    %p125 = pneg %p119
    %p126 = scmp.eq.s32.totalorder %s11, 1
    %p127 = por %p125, %p126
    %p128 = scmp.ne.s32.totalorder %s120, %s123
    %p129 = scmp.eq.s32.totalorder %s11, 0
    %p130 = por %p128, %p129
    %p131 = scmp.ne.s32.totalorder %s120, %s123
    %p132 = scmp.eq.s32.totalorder %s16, 1
    %p133 = por %p131, %p132
    %p134 = scmp.ne.s32.totalorder %s123, %s124
    %p135 = scmp.eq.s32.totalorder %s16, 0
    %p136 = por %p134, %p135
    %p137 = scmp.ne.s32.totalorder %s123, %s124
    %p138 = scmp.eq.s32.totalorder %s17, 1
    %p139 = por %p137, %p138
    %p141 = scmp.ne.s32.totalorder %s124, %s140
    %p142 = scmp.eq.s32.totalorder %s17, 0
    %p143 = por %p141, %p142
    %p144 = scmp.le.s32.totalorder 1, %s11
    %p145 = scmp.lt.s32.totalorder %s11, 3
    %p146 = pnand %p144, %p145
    %p147 = pneg %p146
    // Predicated region
    $region9: #{_unnamed_function_.2} parent=5 // pred_check
      _
    $region10: #{_unnamed_function_.2} parent=5 // pred_check_branch
      %149 = sbr.rel (%p146) target = $region12
    $region11: #{_unnamed_function_.2} parent=5 // pred_region
      %s150 = ssub.s32 %s11, 1
      // Predicated region
      $region13: #{_unnamed_function_.2} parent=11 // pred_check
        %p151 = pneg %p58
      $region14: #{_unnamed_function_.2} parent=11 // pred_check_branch
        %153 = sbr.rel (%p151) target = $region16
      $region15: #{_unnamed_function_.2} parent=11 // pred_region
        _
      $region16: #{_unnamed_function_.2} parent=11 // pred_fallthru
        _
    $region12: #{_unnamed_function_.2} parent=5 // pred_fallthru
      _
    %p154 = scmp.lt.s32.totalorder %s11, 2
    // Predicated region
    $region17: #{_unnamed_function_.2} parent=5 // pred_check
      %p155 = pneg %p154
    $region18: #{_unnamed_function_.2} parent=5 // pred_check_branch
      %157 = sbr.rel (%p155) target = $region20
    $region19: #{_unnamed_function_.2} parent=5 // pred_region
      // Predicated region
      $region21: #{_unnamed_function_.2} parent=19 // pred_check
        %p158 = pneg %p31
      $region22: #{_unnamed_function_.2} parent=19 // pred_check_branch
        %160 = sbr.rel (%p158) target = $region24
      $region23: #{_unnamed_function_.2} parent=19 // pred_region
        %p161 = scmp.lt.s32.totalorder %s11, 1
        %s162 = scalar_select %p161, %s11, 1
        %s163 = smul.addr %s162, 64
        %s164 = smul.addr %s163, 8
        %s165 = scalar_lea.vmem %s0, %s164
      $region24: #{_unnamed_function_.2} parent=19 // pred_fallthru
        _
    $region20: #{_unnamed_function_.2} parent=5 // pred_fallthru
      _
    %p166 = scmp.le.s32.totalorder 1, %s11
    %p167 = scmp.lt.s32.totalorder %s11, 3
    %p168 = pnand %p166, %p167
    %p169 = pneg %p168
    // Predicated region
    $region25: #{_unnamed_function_.2} parent=5 // pred_check
      _
    $region26: #{_unnamed_function_.2} parent=5 // pred_check_branch
      %171 = sbr.rel (%p168) target = $region28
    $region27: #{_unnamed_function_.2} parent=5 // pred_region
      %s172 = ssub.s32 %s11, 1
      %p173 = scmp.lt.s32.totalorder %s16, 1
      %s174 = scalar_select %p173, %s16, 1
      %s175 = smul.addr %s174, 64
      %s176 = smul.addr %s175, 8
      %s177 = scalar_lea.vmem %s0, %s176
      %p178 = pneg %p37
      %p179 = pneg %p34
      %p180 = pneg %p58
      %p181 = pneg %p55
      %p182 = pneg %p84
      %p183 = pneg %p81
      %p184 = scmp.lt.s32.totalorder %s16, 1
      %s185 = scalar_select %p184, %s16, 1
      %s186 = smul.addr %s185, 8
      %s187 = smul.addr %s186, 4
      %s188 = scalar_lea.vmem %s2, %s187
      %p189 = pneg %p110
      %p190 = pneg %p107
      %p191 = scmp.lt.s32.totalorder %s16, 1
      %s192 = scalar_select %p191, %s16, 1
      %s193 = scalar_lea.vmem %s3, %s192
      %p194 = pneg %p136
      %p195 = pneg %p133
      %p196 = scmp.lt.s32.totalorder %s16, 1
      %s197 = scalar_select %p196, %s16, 1
      %s198 = scalar_lea.vmem %s4, %s197
      %p199 = scmp.lt.s32.totalorder %s16, 1
      %s200 = scalar_select %p199, %s16, 1
      %s201 = smul.addr %s200, 64
      %s202 = smul.addr %s201, 8
      %s203 = scalar_lea.vmem %s0, %s202
      %p204 = scmp.lt.s32.totalorder %s16, 1
      %s205 = scalar_select %p204, %s16, 1
      %s206 = smul.addr %s205, 8
      %s207 = smul.addr %s206, 4
      %s208 = scalar_lea.vmem %s2, %s207
      %p209 = scmp.lt.s32.totalorder %s16, 1
      %s210 = scalar_select %p209, %s16, 1
      %s211 = scalar_lea.vmem %s3, %s210
      %p212 = scmp.lt.s32.totalorder %s16, 1
      %s213 = scalar_select %p212, %s16, 1
      %s214 = scalar_lea.vmem %s4, %s213
      %v216 = vld [vmem:[%s203] sm:$0xff]
      %v217 = vld [vmem:[%s203 + $0x8] sm:$0xff]
      %v218 = vld [vmem:[%s203 + $0x10] sm:$0xff]
      %v219 = vld [vmem:[%s203 + $0x18] sm:$0xff]
      %v220 = vld [vmem:[%s203 + $0x20] sm:$0xff]
      %v221 = vld [vmem:[%s203 + $0x28] sm:$0xff]
      %v222 = vld [vmem:[%s203 + $0x30] sm:$0xff]
      %v223 = vld [vmem:[%s203 + $0x38] sm:$0xff]
      %s224 = scalar_lea.vmem %s203, 64
      %v225 = vld [vmem:[%s224] sm:$0xff]
      %v226 = vld [vmem:[%s224 + $0x8] sm:$0xff]
      %v227 = vld [vmem:[%s224 + $0x10] sm:$0xff]
      %v228 = vld [vmem:[%s224 + $0x18] sm:$0xff]
      %v229 = vld [vmem:[%s224 + $0x20] sm:$0xff]
      %v230 = vld [vmem:[%s224 + $0x28] sm:$0xff]
      %v231 = vld [vmem:[%s224 + $0x30] sm:$0xff]
      %v232 = vld [vmem:[%s224 + $0x38] sm:$0xff]
      %v233 = vmax.f32 %v216, %v225
      %v234 = vmax.f32 %v217, %v226
      %v235 = vmax.f32 %v218, %v227
      %v236 = vmax.f32 %v219, %v228
      %v237 = vmax.f32 %v220, %v229
      %v238 = vmax.f32 %v221, %v230
      %v239 = vmax.f32 %v222, %v231
      %v240 = vmax.f32 %v223, %v232
      %s241 = scalar_lea.vmem %s203, 128
      %v242 = vld [vmem:[%s241] sm:$0xff]
      %v243 = vld [vmem:[%s241 + $0x8] sm:$0xff]
      %v244 = vld [vmem:[%s241 + $0x10] sm:$0xff]
      %v245 = vld [vmem:[%s241 + $0x18] sm:$0xff]
      %v246 = vld [vmem:[%s241 + $0x20] sm:$0xff]
      %v247 = vld [vmem:[%s241 + $0x28] sm:$0xff]
      %v248 = vld [vmem:[%s241 + $0x30] sm:$0xff]
      %v249 = vld [vmem:[%s241 + $0x38] sm:$0xff]
      %s250 = scalar_lea.vmem %s203, 192
      %v251 = vld [vmem:[%s250] sm:$0xff]
      %v252 = vld [vmem:[%s250 + $0x8] sm:$0xff]
      %v253 = vld [vmem:[%s250 + $0x10] sm:$0xff]
      %v254 = vld [vmem:[%s250 + $0x18] sm:$0xff]
      %v255 = vld [vmem:[%s250 + $0x20] sm:$0xff]
      %v256 = vld [vmem:[%s250 + $0x28] sm:$0xff]
      %v257 = vld [vmem:[%s250 + $0x30] sm:$0xff]
      %v258 = vld [vmem:[%s250 + $0x38] sm:$0xff]
      %v259 = vmax.f32 %v242, %v251
      %v260 = vmax.f32 %v243, %v252
      %v261 = vmax.f32 %v244, %v253
      %v262 = vmax.f32 %v245, %v254
      %v263 = vmax.f32 %v246, %v255
      %v264 = vmax.f32 %v247, %v256
      %v265 = vmax.f32 %v248, %v257
      %v266 = vmax.f32 %v249, %v258
      %s267 = scalar_lea.vmem %s203, 256
      %v268 = vld [vmem:[%s267] sm:$0xff]
      %v269 = vld [vmem:[%s267 + $0x8] sm:$0xff]
      %v270 = vld [vmem:[%s267 + $0x10] sm:$0xff]
      %v271 = vld [vmem:[%s267 + $0x18] sm:$0xff]
      %v272 = vld [vmem:[%s267 + $0x20] sm:$0xff]
      %v273 = vld [vmem:[%s267 + $0x28] sm:$0xff]
      %v274 = vld [vmem:[%s267 + $0x30] sm:$0xff]
      %v275 = vld [vmem:[%s267 + $0x38] sm:$0xff]
      %s276 = scalar_lea.vmem %s203, 320
      %v277 = vld [vmem:[%s276] sm:$0xff]
      %v278 = vld [vmem:[%s276 + $0x8] sm:$0xff]
      %v279 = vld [vmem:[%s276 + $0x10] sm:$0xff]
      %v280 = vld [vmem:[%s276 + $0x18] sm:$0xff]
      %v281 = vld [vmem:[%s276 + $0x20] sm:$0xff]
      %v282 = vld [vmem:[%s276 + $0x28] sm:$0xff]
      %v283 = vld [vmem:[%s276 + $0x30] sm:$0xff]
      %v284 = vld [vmem:[%s276 + $0x38] sm:$0xff]
      %v285 = vmax.f32 %v268, %v277
      %v286 = vmax.f32 %v269, %v278
      %v287 = vmax.f32 %v270, %v279
      %v288 = vmax.f32 %v271, %v280
      %v289 = vmax.f32 %v272, %v281
      %v290 = vmax.f32 %v273, %v282
      %v291 = vmax.f32 %v274, %v283
      %v292 = vmax.f32 %v275, %v284
      %s293 = scalar_lea.vmem %s203, 384
      %v294 = vld [vmem:[%s293] sm:$0xff]
      %v295 = vld [vmem:[%s293 + $0x8] sm:$0xff]
      %v296 = vld [vmem:[%s293 + $0x10] sm:$0xff]
      %v297 = vld [vmem:[%s293 + $0x18] sm:$0xff]
      %v298 = vld [vmem:[%s293 + $0x20] sm:$0xff]
      %v299 = vld [vmem:[%s293 + $0x28] sm:$0xff]
      %v300 = vld [vmem:[%s293 + $0x30] sm:$0xff]
      %v301 = vld [vmem:[%s293 + $0x38] sm:$0xff]
      %s302 = scalar_lea.vmem %s203, 448
      %v303 = vld [vmem:[%s302] sm:$0xff]
      %v304 = vld [vmem:[%s302 + $0x8] sm:$0xff]
      %v305 = vld [vmem:[%s302 + $0x10] sm:$0xff]
      %v306 = vld [vmem:[%s302 + $0x18] sm:$0xff]
      %v307 = vld [vmem:[%s302 + $0x20] sm:$0xff]
      %v308 = vld [vmem:[%s302 + $0x28] sm:$0xff]
      %v309 = vld [vmem:[%s302 + $0x30] sm:$0xff]
      %v310 = vld [vmem:[%s302 + $0x38] sm:$0xff]
      %v311 = vmax.f32 %v294, %v303
      %v312 = vmax.f32 %v295, %v304
      %v313 = vmax.f32 %v296, %v305
      %v314 = vmax.f32 %v297, %v306
      %v315 = vmax.f32 %v298, %v307
      %v316 = vmax.f32 %v299, %v308
      %v317 = vmax.f32 %v300, %v309
      %v318 = vmax.f32 %v301, %v310
      %v319 = vmax.f32 %v233, %v259
      %v320 = vmax.f32 %v234, %v260
      %v321 = vmax.f32 %v235, %v261
      %v322 = vmax.f32 %v236, %v262
      %v323 = vmax.f32 %v237, %v263
      %v324 = vmax.f32 %v238, %v264
      %v325 = vmax.f32 %v239, %v265
      %v326 = vmax.f32 %v240, %v266
      %v327 = vmax.f32 %v285, %v311
      %v328 = vmax.f32 %v286, %v312
      %v329 = vmax.f32 %v287, %v313
      %v330 = vmax.f32 %v288, %v314
      %v331 = vmax.f32 %v289, %v315
      %v332 = vmax.f32 %v290, %v316
      %v333 = vmax.f32 %v291, %v317
      %v334 = vmax.f32 %v292, %v318
      %v335 = vmax.f32 %v319, %v327
      %v336 = vmax.f32 %v320, %v328
      %v337 = vmax.f32 %v321, %v329
      %v338 = vmax.f32 %v322, %v330
      %v339 = vmax.f32 %v323, %v331
      %v340 = vmax.f32 %v324, %v332
      %v341 = vmax.f32 %v325, %v333
      %v342 = vmax.f32 %v326, %v334
      %343 = vst [vmem:[#allocation2] sm:$0xff] 0.0
      %344 = vst [vmem:[#allocation2 + $0x8] sm:$0x3] 0.0
      %s345 = scalar_lea.vmem [#allocation2], 144
      %346 = vst [vmem:[%s345] sm:$0xff] 0.0
      %347 = vst [vmem:[%s345 + $0x8] sm:$0x3] 0.0
      %s348 = scalar_lea.vmem [#allocation2], 16
      %349 = vst [vmem:[%s348] sm:$0x1] 0.0
      %350 = vst [vmem:[%s348 + $0x10] sm:$0x1] 0.0
      %351 = vst [vmem:[%s348 + $0x20] sm:$0x1] 0.0
      %352 = vst [vmem:[%s348 + $0x30] sm:$0x1] 0.0
      %353 = vst [vmem:[%s348 + $0x40] sm:$0x1] 0.0
      %354 = vst [vmem:[%s348 + $0x50] sm:$0x1] 0.0
      %355 = vst [vmem:[%s348 + $0x60] sm:$0x1] 0.0
      %356 = vst [vmem:[%s348 + $0x70] sm:$0x1] 0.0
      %357 = vst [vmem:[%s348 + $0x9] sm:$0x1] 0.0
      %358 = vst [vmem:[%s348 + $0x19] sm:$0x1] 0.0
      %359 = vst [vmem:[%s348 + $0x29] sm:$0x1] 0.0
      %360 = vst [vmem:[%s348 + $0x39] sm:$0x1] 0.0
      %361 = vst [vmem:[%s348 + $0x49] sm:$0x1] 0.0
      %362 = vst [vmem:[%s348 + $0x59] sm:$0x1] 0.0
      %363 = vst [vmem:[%s348 + $0x69] sm:$0x1] 0.0
      %364 = vst [vmem:[%s348 + $0x79] sm:$0x1] 0.0
      %365 = vst [vmem:[%s348 + $0x1] sm:$0xff] %v335
      %366 = vst [vmem:[%s348 + $0x11] sm:$0xff] %v336
      %367 = vst [vmem:[%s348 + $0x21] sm:$0xff] %v337
      %368 = vst [vmem:[%s348 + $0x31] sm:$0xff] %v338
      %369 = vst [vmem:[%s348 + $0x41] sm:$0xff] %v339
      %370 = vst [vmem:[%s348 + $0x51] sm:$0xff] %v340
      %371 = vst [vmem:[%s348 + $0x61] sm:$0xff] %v341
      %372 = vst [vmem:[%s348 + $0x71] sm:$0xff] %v342
      %v373 = vld [vmem:[#allocation2] sm:$0xff]
      %v374 = vld [vmem:[#allocation2 + $0x10] sm:$0xff]
      %v375 = vld [vmem:[#allocation2 + $0x20] sm:$0xff]
      %v376 = vld [vmem:[#allocation2 + $0x30] sm:$0xff]
      %v377 = vld [vmem:[#allocation2 + $0x40] sm:$0xff]
      %v378 = vld [vmem:[#allocation2 + $0x50] sm:$0xff]
      %v379 = vld [vmem:[#allocation2 + $0x60] sm:$0xff]
      %v380 = vld [vmem:[#allocation2 + $0x70] sm:$0xff]
      %v381 = vpack.c.bf16 %v374, %v373
      %v382 = vpack.c.bf16 %v376, %v375
      %v383 = vpack.c.bf16 %v378, %v377
      %v384 = vpack.c.bf16 %v380, %v379
      %v389 = vunpack.c.l.b16 %v381
      %v390 = vunpack.c.h.b16 %v381
      %v391 = vunpack.c.l.b16 %v382
      %v392 = vunpack.c.h.b16 %v382
      %v393 = vunpack.c.l.b16 %v383
      %v394 = vunpack.c.h.b16 %v383
      %v395 = vunpack.c.l.b16 %v384
      %v396 = vunpack.c.h.b16 %v384
      %v397 = vpack.c.b16 %v389, %v389
      %v398 = vpack.c.b16 %v390, %v390
      %v399 = vpack.c.b16 %v391, %v391
      %v400 = vpack.c.b16 %v392, %v392
      %v401 = vpack.c.b16 %v393, %v393
      %v402 = vpack.c.b16 %v394, %v394
      %v403 = vpack.c.b16 %v395, %v395
      %v404 = vpack.c.b16 %v396, %v396
      %413 = vst [vmem:[#allocation3] sm:$0xf] %v397
      %414 = vst [vmem:[#allocation3 + $0x24] sm:$0xf] %v398
      %415 = vst [vmem:[#allocation3 + $0x48] sm:$0xf] %v399
      %416 = vst [vmem:[#allocation3 + $0x6c] sm:$0xf] %v400
      %417 = vst [vmem:[#allocation3 + $0x90] sm:$0xf] %v401
      %418 = vst [vmem:[#allocation3 + $0xb4] sm:$0xf] %v402
      %419 = vst [vmem:[#allocation3 + $0xd8] sm:$0xf] %v403
      %420 = vst [vmem:[#allocation3 + $0xfc] sm:$0xf] %v404
      %v421 = vld [vmem:[#allocation2 + $0x1] sm:$0xff]
      %v422 = vld [vmem:[#allocation2 + $0x11] sm:$0xff]
      %v423 = vld [vmem:[#allocation2 + $0x21] sm:$0xff]
      %v424 = vld [vmem:[#allocation2 + $0x31] sm:$0xff]
      %v425 = vld [vmem:[#allocation2 + $0x41] sm:$0xff]
      %v426 = vld [vmem:[#allocation2 + $0x51] sm:$0xff]
      %v427 = vld [vmem:[#allocation2 + $0x61] sm:$0xff]
      %v428 = vld [vmem:[#allocation2 + $0x71] sm:$0xff]
      %v429 = vpack.c.bf16 %v422, %v421
      %v430 = vpack.c.bf16 %v424, %v423
      %v431 = vpack.c.bf16 %v426, %v425
      %v432 = vpack.c.bf16 %v428, %v427
      %v437 = vunpack.c.l.b16 %v429
      %v438 = vunpack.c.h.b16 %v429
      %v439 = vunpack.c.l.b16 %v430
      %v440 = vunpack.c.h.b16 %v430
      %v441 = vunpack.c.l.b16 %v431
      %v442 = vunpack.c.h.b16 %v431
      %v443 = vunpack.c.l.b16 %v432
      %v444 = vunpack.c.h.b16 %v432
      %v445 = vpack.c.b16 %v437, %v437
      %v446 = vpack.c.b16 %v438, %v438
      %v447 = vpack.c.b16 %v439, %v439
      %v448 = vpack.c.b16 %v440, %v440
      %v449 = vpack.c.b16 %v441, %v441
      %v450 = vpack.c.b16 %v442, %v442
      %v451 = vpack.c.b16 %v443, %v443
      %v452 = vpack.c.b16 %v444, %v444
      %461 = vst [vmem:[#allocation3 + $0x4] sm:$0xf] %v445
      %462 = vst [vmem:[#allocation3 + $0x28] sm:$0xf] %v446
      %463 = vst [vmem:[#allocation3 + $0x4c] sm:$0xf] %v447
      %464 = vst [vmem:[#allocation3 + $0x70] sm:$0xf] %v448
      %465 = vst [vmem:[#allocation3 + $0x94] sm:$0xf] %v449
      %466 = vst [vmem:[#allocation3 + $0xb8] sm:$0xf] %v450
      %467 = vst [vmem:[#allocation3 + $0xdc] sm:$0xf] %v451
      %468 = vst [vmem:[#allocation3 + $0x100] sm:$0xf] %v452
      %v469 = vld [vmem:[#allocation2 + $0x2] sm:$0xff]
      %v470 = vld [vmem:[#allocation2 + $0x12] sm:$0xff]
      %v471 = vld [vmem:[#allocation2 + $0x22] sm:$0xff]
      %v472 = vld [vmem:[#allocation2 + $0x32] sm:$0xff]
      %v473 = vld [vmem:[#allocation2 + $0x42] sm:$0xff]
      %v474 = vld [vmem:[#allocation2 + $0x52] sm:$0xff]
      %v475 = vld [vmem:[#allocation2 + $0x62] sm:$0xff]
      %v476 = vld [vmem:[#allocation2 + $0x72] sm:$0xff]
      %v477 = vpack.c.bf16 %v470, %v469
      %v478 = vpack.c.bf16 %v472, %v471
      %v479 = vpack.c.bf16 %v474, %v473
      %v480 = vpack.c.bf16 %v476, %v475
      %v485 = vunpack.c.l.b16 %v477
      %v486 = vunpack.c.h.b16 %v477
      %v487 = vunpack.c.l.b16 %v478
      %v488 = vunpack.c.h.b16 %v478
      %v489 = vunpack.c.l.b16 %v479
      %v490 = vunpack.c.h.b16 %v479
      %v491 = vunpack.c.l.b16 %v480
      %v492 = vunpack.c.h.b16 %v480
      %v493 = vpack.c.b16 %v485, %v485
      %v494 = vpack.c.b16 %v486, %v486
      %v495 = vpack.c.b16 %v487, %v487
      %v496 = vpack.c.b16 %v488, %v488
      %v497 = vpack.c.b16 %v489, %v489
      %v498 = vpack.c.b16 %v490, %v490
      %v499 = vpack.c.b16 %v491, %v491
      %v500 = vpack.c.b16 %v492, %v492
      %509 = vst [vmem:[#allocation3 + $0x8] sm:$0xf] %v493
      %510 = vst [vmem:[#allocation3 + $0x2c] sm:$0xf] %v494
      %511 = vst [vmem:[#allocation3 + $0x50] sm:$0xf] %v495
      %512 = vst [vmem:[#allocation3 + $0x74] sm:$0xf] %v496
      %513 = vst [vmem:[#allocation3 + $0x98] sm:$0xf] %v497
      %514 = vst [vmem:[#allocation3 + $0xbc] sm:$0xf] %v498
      %515 = vst [vmem:[#allocation3 + $0xe0] sm:$0xf] %v499
      %516 = vst [vmem:[#allocation3 + $0x104] sm:$0xf] %v500
      %v517 = vld [vmem:[%s348] sm:$0xff]
      %v518 = vld [vmem:[%s348 + $0x10] sm:$0xff]
      %v519 = vld [vmem:[%s348 + $0x20] sm:$0xff]
      %v520 = vld [vmem:[%s348 + $0x30] sm:$0xff]
      %v521 = vld [vmem:[%s348 + $0x40] sm:$0xff]
      %v522 = vld [vmem:[%s348 + $0x50] sm:$0xff]
      %v523 = vld [vmem:[%s348 + $0x60] sm:$0xff]
      %v524 = vld [vmem:[%s348 + $0x70] sm:$0xff]
      %v525 = vpack.c.bf16 %v518, %v517
      %v526 = vpack.c.bf16 %v520, %v519
      %v527 = vpack.c.bf16 %v522, %v521
      %v528 = vpack.c.bf16 %v524, %v523
      %v533 = vunpack.c.l.b16 %v525
      %v534 = vunpack.c.h.b16 %v525
      %v535 = vunpack.c.l.b16 %v526
      %v536 = vunpack.c.h.b16 %v526
      %v537 = vunpack.c.l.b16 %v527
      %v538 = vunpack.c.h.b16 %v527
      %v539 = vunpack.c.l.b16 %v528
      %v540 = vunpack.c.h.b16 %v528
      %v541 = vpack.c.b16 %v533, %v533
      %v542 = vpack.c.b16 %v534, %v534
      %v543 = vpack.c.b16 %v535, %v535
      %v544 = vpack.c.b16 %v536, %v536
      %v545 = vpack.c.b16 %v537, %v537
      %v546 = vpack.c.b16 %v538, %v538
      %v547 = vpack.c.b16 %v539, %v539
      %v548 = vpack.c.b16 %v540, %v540
      %557 = vst [vmem:[#allocation3 + $0xc] sm:$0xf] %v541
      %558 = vst [vmem:[#allocation3 + $0x30] sm:$0xf] %v542
      %559 = vst [vmem:[#allocation3 + $0x54] sm:$0xf] %v543
      %560 = vst [vmem:[#allocation3 + $0x78] sm:$0xf] %v544
      %561 = vst [vmem:[#allocation3 + $0x9c] sm:$0xf] %v545
      %562 = vst [vmem:[#allocation3 + $0xc0] sm:$0xf] %v546
      %563 = vst [vmem:[#allocation3 + $0xe4] sm:$0xf] %v547
      %564 = vst [vmem:[#allocation3 + $0x108] sm:$0xf] %v548
      %v565 = vld [vmem:[%s348 + $0x1] sm:$0xff]
      %v566 = vld [vmem:[%s348 + $0x11] sm:$0xff]
      %v567 = vld [vmem:[%s348 + $0x21] sm:$0xff]
      %v568 = vld [vmem:[%s348 + $0x31] sm:$0xff]
      %v569 = vld [vmem:[%s348 + $0x41] sm:$0xff]
      %v570 = vld [vmem:[%s348 + $0x51] sm:$0xff]
      %v571 = vld [vmem:[%s348 + $0x61] sm:$0xff]
      %v572 = vld [vmem:[%s348 + $0x71] sm:$0xff]
      %v573 = vpack.c.bf16 %v566, %v565
      %v574 = vpack.c.bf16 %v568, %v567
      %v575 = vpack.c.bf16 %v570, %v569
      %v576 = vpack.c.bf16 %v572, %v571
      %v581 = vunpack.c.l.b16 %v573
      %v582 = vunpack.c.h.b16 %v573
      %v583 = vunpack.c.l.b16 %v574
      %v584 = vunpack.c.h.b16 %v574
      %v585 = vunpack.c.l.b16 %v575
      %v586 = vunpack.c.h.b16 %v575
      %v587 = vunpack.c.l.b16 %v576
      %v588 = vunpack.c.h.b16 %v576
      %v589 = vpack.c.b16 %v581, %v581
      %v590 = vpack.c.b16 %v582, %v582
      %v591 = vpack.c.b16 %v583, %v583
      %v592 = vpack.c.b16 %v584, %v584
      %v593 = vpack.c.b16 %v585, %v585
      %v594 = vpack.c.b16 %v586, %v586
      %v595 = vpack.c.b16 %v587, %v587
      %v596 = vpack.c.b16 %v588, %v588
      %605 = vst [vmem:[#allocation3 + $0x10] sm:$0xf] %v589
      %606 = vst [vmem:[#allocation3 + $0x34] sm:$0xf] %v590
      %607 = vst [vmem:[#allocation3 + $0x58] sm:$0xf] %v591
      %608 = vst [vmem:[#allocation3 + $0x7c] sm:$0xf] %v592
      %609 = vst [vmem:[#allocation3 + $0xa0] sm:$0xf] %v593
      %610 = vst [vmem:[#allocation3 + $0xc4] sm:$0xf] %v594
      %611 = vst [vmem:[#allocation3 + $0xe8] sm:$0xf] %v595
      %612 = vst [vmem:[#allocation3 + $0x10c] sm:$0xf] %v596
      %v613 = vld [vmem:[%s348 + $0x2] sm:$0xff]
      %v614 = vld [vmem:[%s348 + $0x12] sm:$0xff]
      %v615 = vld [vmem:[%s348 + $0x22] sm:$0xff]
      %v616 = vld [vmem:[%s348 + $0x32] sm:$0xff]
      %v617 = vld [vmem:[%s348 + $0x42] sm:$0xff]
      %v618 = vld [vmem:[%s348 + $0x52] sm:$0xff]
      %v619 = vld [vmem:[%s348 + $0x62] sm:$0xff]
      %v620 = vld [vmem:[%s348 + $0x72] sm:$0xff]
      %v621 = vpack.c.bf16 %v614, %v613
      %v622 = vpack.c.bf16 %v616, %v615
      %v623 = vpack.c.bf16 %v618, %v617
      %v624 = vpack.c.bf16 %v620, %v619
      %v629 = vunpack.c.l.b16 %v621
      %v630 = vunpack.c.h.b16 %v621
      %v631 = vunpack.c.l.b16 %v622
      %v632 = vunpack.c.h.b16 %v622
      %v633 = vunpack.c.l.b16 %v623
      %v634 = vunpack.c.h.b16 %v623
      %v635 = vunpack.c.l.b16 %v624
      %v636 = vunpack.c.h.b16 %v624
      %v637 = vpack.c.b16 %v629, %v629
      %v638 = vpack.c.b16 %v630, %v630
      %v639 = vpack.c.b16 %v631, %v631
      %v640 = vpack.c.b16 %v632, %v632
      %v641 = vpack.c.b16 %v633, %v633
      %v642 = vpack.c.b16 %v634, %v634
      %v643 = vpack.c.b16 %v635, %v635
      %v644 = vpack.c.b16 %v636, %v636
      %653 = vst [vmem:[#allocation3 + $0x14] sm:$0xf] %v637
      %654 = vst [vmem:[#allocation3 + $0x38] sm:$0xf] %v638
      %655 = vst [vmem:[#allocation3 + $0x5c] sm:$0xf] %v639
      %656 = vst [vmem:[#allocation3 + $0x80] sm:$0xf] %v640
      %657 = vst [vmem:[#allocation3 + $0xa4] sm:$0xf] %v641
      %658 = vst [vmem:[#allocation3 + $0xc8] sm:$0xf] %v642
      %659 = vst [vmem:[#allocation3 + $0xec] sm:$0xf] %v643
      %660 = vst [vmem:[#allocation3 + $0x110] sm:$0xf] %v644
      %s661 = scalar_lea.vmem [#allocation2], 32
      %v662 = vld [vmem:[%s661] sm:$0xff]
      %v663 = vld [vmem:[%s661 + $0x10] sm:$0xff]
      %v664 = vld [vmem:[%s661 + $0x20] sm:$0xff]
      %v665 = vld [vmem:[%s661 + $0x30] sm:$0xff]
      %v666 = vld [vmem:[%s661 + $0x40] sm:$0xff]
      %v667 = vld [vmem:[%s661 + $0x50] sm:$0xff]
      %v668 = vld [vmem:[%s661 + $0x60] sm:$0xff]
      %v669 = vld [vmem:[%s661 + $0x70] sm:$0xff]
      %v670 = vpack.c.bf16 %v663, %v662
      %v671 = vpack.c.bf16 %v665, %v664
      %v672 = vpack.c.bf16 %v667, %v666
      %v673 = vpack.c.bf16 %v669, %v668
      %v678 = vunpack.c.l.b16 %v670
      %v679 = vunpack.c.h.b16 %v670
      %v680 = vunpack.c.l.b16 %v671
      %v681 = vunpack.c.h.b16 %v671
      %v682 = vunpack.c.l.b16 %v672
      %v683 = vunpack.c.h.b16 %v672
      %v684 = vunpack.c.l.b16 %v673
      %v685 = vunpack.c.h.b16 %v673
      %v686 = vpack.c.b16 %v678, %v678
      %v687 = vpack.c.b16 %v679, %v679
      %v688 = vpack.c.b16 %v680, %v680
      %v689 = vpack.c.b16 %v681, %v681
      %v690 = vpack.c.b16 %v682, %v682
      %v691 = vpack.c.b16 %v683, %v683
      %v692 = vpack.c.b16 %v684, %v684
      %v693 = vpack.c.b16 %v685, %v685
      %702 = vst [vmem:[#allocation3 + $0x18] sm:$0xf] %v686
      %703 = vst [vmem:[#allocation3 + $0x3c] sm:$0xf] %v687
      %704 = vst [vmem:[#allocation3 + $0x60] sm:$0xf] %v688
      %705 = vst [vmem:[#allocation3 + $0x84] sm:$0xf] %v689
      %706 = vst [vmem:[#allocation3 + $0xa8] sm:$0xf] %v690
      %707 = vst [vmem:[#allocation3 + $0xcc] sm:$0xf] %v691
      %708 = vst [vmem:[#allocation3 + $0xf0] sm:$0xf] %v692
      %709 = vst [vmem:[#allocation3 + $0x114] sm:$0xf] %v693
      %v710 = vld [vmem:[%s661 + $0x1] sm:$0xff]
      %v711 = vld [vmem:[%s661 + $0x11] sm:$0xff]
      %v712 = vld [vmem:[%s661 + $0x21] sm:$0xff]
      %v713 = vld [vmem:[%s661 + $0x31] sm:$0xff]
      %v714 = vld [vmem:[%s661 + $0x41] sm:$0xff]
      %v715 = vld [vmem:[%s661 + $0x51] sm:$0xff]
      %v716 = vld [vmem:[%s661 + $0x61] sm:$0xff]
      %v717 = vld [vmem:[%s661 + $0x71] sm:$0xff]
      %v718 = vpack.c.bf16 %v711, %v710
      %v719 = vpack.c.bf16 %v713, %v712
      %v720 = vpack.c.bf16 %v715, %v714
      %v721 = vpack.c.bf16 %v717, %v716
      %v726 = vunpack.c.l.b16 %v718
      %v727 = vunpack.c.h.b16 %v718
      %v728 = vunpack.c.l.b16 %v719
      %v729 = vunpack.c.h.b16 %v719
      %v730 = vunpack.c.l.b16 %v720
      %v731 = vunpack.c.h.b16 %v720
      %v732 = vunpack.c.l.b16 %v721
      %v733 = vunpack.c.h.b16 %v721
      %v734 = vpack.c.b16 %v726, %v726
      %v735 = vpack.c.b16 %v727, %v727
      %v736 = vpack.c.b16 %v728, %v728
      %v737 = vpack.c.b16 %v729, %v729
      %v738 = vpack.c.b16 %v730, %v730
      %v739 = vpack.c.b16 %v731, %v731
      %v740 = vpack.c.b16 %v732, %v732
      %v741 = vpack.c.b16 %v733, %v733
      %750 = vst [vmem:[#allocation3 + $0x1c] sm:$0xf] %v734
      %751 = vst [vmem:[#allocation3 + $0x40] sm:$0xf] %v735
      %752 = vst [vmem:[#allocation3 + $0x64] sm:$0xf] %v736
      %753 = vst [vmem:[#allocation3 + $0x88] sm:$0xf] %v737
      %754 = vst [vmem:[#allocation3 + $0xac] sm:$0xf] %v738
      %755 = vst [vmem:[#allocation3 + $0xd0] sm:$0xf] %v739
      %756 = vst [vmem:[#allocation3 + $0xf4] sm:$0xf] %v740
      %757 = vst [vmem:[#allocation3 + $0x118] sm:$0xf] %v741
      %v758 = vld [vmem:[%s661 + $0x2] sm:$0xff]
      %v759 = vld [vmem:[%s661 + $0x12] sm:$0xff]
      %v760 = vld [vmem:[%s661 + $0x22] sm:$0xff]
      %v761 = vld [vmem:[%s661 + $0x32] sm:$0xff]
      %v762 = vld [vmem:[%s661 + $0x42] sm:$0xff]
      %v763 = vld [vmem:[%s661 + $0x52] sm:$0xff]
      %v764 = vld [vmem:[%s661 + $0x62] sm:$0xff]
      %v765 = vld [vmem:[%s661 + $0x72] sm:$0xff]
      %v766 = vpack.c.bf16 %v759, %v758
      %v767 = vpack.c.bf16 %v761, %v760
      %v768 = vpack.c.bf16 %v763, %v762
      %v769 = vpack.c.bf16 %v765, %v764
      %v774 = vunpack.c.l.b16 %v766
      %v775 = vunpack.c.h.b16 %v766
      %v776 = vunpack.c.l.b16 %v767
      %v777 = vunpack.c.h.b16 %v767
      %v778 = vunpack.c.l.b16 %v768
      %v779 = vunpack.c.h.b16 %v768
      %v780 = vunpack.c.l.b16 %v769
      %v781 = vunpack.c.h.b16 %v769
      %v782 = vpack.c.b16 %v774, %v774
      %v783 = vpack.c.b16 %v775, %v775
      %v784 = vpack.c.b16 %v776, %v776
      %v785 = vpack.c.b16 %v777, %v777
      %v786 = vpack.c.b16 %v778, %v778
      %v787 = vpack.c.b16 %v779, %v779
      %v788 = vpack.c.b16 %v780, %v780
      %v789 = vpack.c.b16 %v781, %v781
      %798 = vst [vmem:[#allocation3 + $0x20] sm:$0xf] %v782
      %799 = vst [vmem:[#allocation3 + $0x44] sm:$0xf] %v783
      %800 = vst [vmem:[#allocation3 + $0x68] sm:$0xf] %v784
      %801 = vst [vmem:[#allocation3 + $0x8c] sm:$0xf] %v785
      %802 = vst [vmem:[#allocation3 + $0xb0] sm:$0xf] %v786
      %803 = vst [vmem:[#allocation3 + $0xd4] sm:$0xf] %v787
      %804 = vst [vmem:[#allocation3 + $0xf8] sm:$0xf] %v788
      %805 = vst [vmem:[#allocation3 + $0x11c] sm:$0xf] %v789
      %v806 = vld [vmem:[#allocation3] sm:$0xff]
      %v807 = vld [vmem:[#allocation3 + $0x8] sm:$0xff]
      %v808 = vld [vmem:[#allocation3 + $0x10] sm:$0xff]
      %v809 = vld [vmem:[#allocation3 + $0x18] sm:$0xff]
      %v810 = vld [vmem:[#allocation3 + $0x20] sm:$0xf]
      %v811 = vld [vmem:[#allocation3 + $0x24] sm:$0xff]
      %v812 = vld [vmem:[#allocation3 + $0x2c] sm:$0xff]
      %v813 = vld [vmem:[#allocation3 + $0x34] sm:$0xff]
      %v814 = vld [vmem:[#allocation3 + $0x3c] sm:$0xff]
      %v815 = vld [vmem:[#allocation3 + $0x44] sm:$0xf]
      %v816 = vld [vmem:[#allocation3 + $0x48] sm:$0xff]
      %v817 = vld [vmem:[#allocation3 + $0x50] sm:$0xff]
      %v818 = vld [vmem:[#allocation3 + $0x58] sm:$0xff]
      %v819 = vld [vmem:[#allocation3 + $0x60] sm:$0xff]
      %v820 = vld [vmem:[#allocation3 + $0x68] sm:$0xf]
      %v821 = vld [vmem:[#allocation3 + $0x6c] sm:$0xff]
      %v822 = vld [vmem:[#allocation3 + $0x74] sm:$0xff]
      %v823 = vld [vmem:[#allocation3 + $0x7c] sm:$0xff]
      %v824 = vld [vmem:[#allocation3 + $0x84] sm:$0xff]
      %v825 = vld [vmem:[#allocation3 + $0x8c] sm:$0xf]
      %v826 = vld [vmem:[#allocation3 + $0x90] sm:$0xff]
      %v827 = vld [vmem:[#allocation3 + $0x98] sm:$0xff]
      %v828 = vld [vmem:[#allocation3 + $0xa0] sm:$0xff]
      %v829 = vld [vmem:[#allocation3 + $0xa8] sm:$0xff]
      %v830 = vld [vmem:[#allocation3 + $0xb0] sm:$0xf]
      %v831 = vld [vmem:[#allocation3 + $0xb4] sm:$0xff]
      %v832 = vld [vmem:[#allocation3 + $0xbc] sm:$0xff]
      %v833 = vld [vmem:[#allocation3 + $0xc4] sm:$0xff]
      %v834 = vld [vmem:[#allocation3 + $0xcc] sm:$0xff]
      %v835 = vld [vmem:[#allocation3 + $0xd4] sm:$0xf]
      %v836 = vld [vmem:[#allocation3 + $0xd8] sm:$0xff]
      %v837 = vld [vmem:[#allocation3 + $0xe0] sm:$0xff]
      %v838 = vld [vmem:[#allocation3 + $0xe8] sm:$0xff]
      %v839 = vld [vmem:[#allocation3 + $0xf0] sm:$0xff]
      %v840 = vld [vmem:[#allocation3 + $0xf8] sm:$0xf]
      %v841 = vld [vmem:[#allocation3 + $0xfc] sm:$0xff]
      %v842 = vld [vmem:[#allocation3 + $0x104] sm:$0xff]
      %v843 = vld [vmem:[#allocation3 + $0x10c] sm:$0xff]
      %v844 = vld [vmem:[#allocation3 + $0x114] sm:$0xff]
      %v845 = vld [vmem:[#allocation3 + $0x11c] sm:$0xf]
      %v846 = vld [vmem:[%s1] sm:$0xf]
      %v847 = vld [vmem:[%s1 + $0x4] sm:$0xf]
      %v848 = vld [vmem:[%s1 + $0x8] sm:$0xf]
      %v849 = vld [vmem:[%s1 + $0xc] sm:$0xf]
      %v850 = vld [vmem:[%s1 + $0x10] sm:$0xf]
      %v851 = vld [vmem:[%s1 + $0x14] sm:$0xf]
      %v852 = vld [vmem:[%s1 + $0x18] sm:$0xf]
      %v853 = vld [vmem:[%s1 + $0x1c] sm:$0xf]
      %v854 = vld [vmem:[%s1 + $0x20] sm:$0xf]
      %v855 = vld [vmem:[%s1 + $0x24] sm:$0xf]
      %v856 = vld [vmem:[%s1 + $0x28] sm:$0xf]
      %v857 = vld [vmem:[%s1 + $0x2c] sm:$0xf]
      %v858 = vld [vmem:[%s1 + $0x30] sm:$0xf]
      %v859 = vld [vmem:[%s1 + $0x34] sm:$0xf]
      %v860 = vld [vmem:[%s1 + $0x38] sm:$0xf]
      %v861 = vld [vmem:[%s1 + $0x3c] sm:$0xf]
      %v862 = vld [vmem:[%s1 + $0x40] sm:$0xf]
      %v863 = vld [vmem:[%s1 + $0x44] sm:$0xf]
      %v864 = vld [vmem:[%s1 + $0x48] sm:$0xf]
      %v865 = vld [vmem:[%s1 + $0x4c] sm:$0xf]
      %v866 = vld [vmem:[%s1 + $0x50] sm:$0xf]
      %v867 = vld [vmem:[%s1 + $0x54] sm:$0xf]
      %v868 = vld [vmem:[%s1 + $0x58] sm:$0xf]
      %v869 = vld [vmem:[%s1 + $0x5c] sm:$0xf]
      %v870 = vld [vmem:[%s1 + $0x60] sm:$0xf]
      %v871 = vld [vmem:[%s1 + $0x64] sm:$0xf]
      %v872 = vld [vmem:[%s1 + $0x68] sm:$0xf]
      %v873 = vld [vmem:[%s1 + $0x6c] sm:$0xf]
      %v874 = vld [vmem:[%s1 + $0x70] sm:$0xf]
      %v875 = vld [vmem:[%s1 + $0x74] sm:$0xf]
      %v876 = vld [vmem:[%s1 + $0x78] sm:$0xf]
      %v877 = vld [vmem:[%s1 + $0x7c] sm:$0xf]
      %v878 = vld [vmem:[%s1 + $0x80] sm:$0xf]
      %v879 = vld [vmem:[%s1 + $0x84] sm:$0xf]
      %v880 = vld [vmem:[%s1 + $0x88] sm:$0xf]
      %v881 = vld [vmem:[%s1 + $0x8c] sm:$0xf]
      %v882 = vld [vmem:[%s1 + $0x90] sm:$0xf]
      %v883 = vld [vmem:[%s1 + $0x94] sm:$0xf]
      %v884 = vld [vmem:[%s1 + $0x98] sm:$0xf]
      %v885 = vld [vmem:[%s1 + $0x9c] sm:$0xf]
      %v886 = vld [vmem:[%s1 + $0xa0] sm:$0xf]
      %v887 = vld [vmem:[%s1 + $0xa4] sm:$0xf]
      %v888 = vld [vmem:[%s1 + $0xa8] sm:$0xf]
      %v889 = vld [vmem:[%s1 + $0xac] sm:$0xf]
      %v890 = vld [vmem:[%s1 + $0xb0] sm:$0xf]
      %v891 = vld [vmem:[%s1 + $0xb4] sm:$0xf]
      %v892 = vld [vmem:[%s1 + $0xb8] sm:$0xf]
      %v893 = vld [vmem:[%s1 + $0xbc] sm:$0xf]
      %v894 = vld [vmem:[%s1 + $0xc0] sm:$0xf]
      %v895 = vld [vmem:[%s1 + $0xc4] sm:$0xf]
      %v896 = vld [vmem:[%s1 + $0xc8] sm:$0xf]
      %v897 = vld [vmem:[%s1 + $0xcc] sm:$0xf]
      %v898 = vld [vmem:[%s1 + $0xd0] sm:$0xf]
      %v899 = vld [vmem:[%s1 + $0xd4] sm:$0xf]
      %v900 = vld [vmem:[%s1 + $0xd8] sm:$0xf]
      %v901 = vld [vmem:[%s1 + $0xdc] sm:$0xf]
      %v902 = vld [vmem:[%s1 + $0xe0] sm:$0xf]
      %v903 = vld [vmem:[%s1 + $0xe4] sm:$0xf]
      %v904 = vld [vmem:[%s1 + $0xe8] sm:$0xf]
      %v905 = vld [vmem:[%s1 + $0xec] sm:$0xf]
      %v906 = vld [vmem:[%s1 + $0xf0] sm:$0xf]
      %v907 = vld [vmem:[%s1 + $0xf4] sm:$0xf]
      %v908 = vld [vmem:[%s1 + $0xf8] sm:$0xf]
      %v909 = vld [vmem:[%s1 + $0xfc] sm:$0xf]
      %v910 = vld [vmem:[%s1 + $0x100] sm:$0xf]
      %v911 = vld [vmem:[%s1 + $0x104] sm:$0xf]
      %v912 = vld [vmem:[%s1 + $0x108] sm:$0xf]
      %v913 = vld [vmem:[%s1 + $0x10c] sm:$0xf]
      %v914 = vld [vmem:[%s1 + $0x110] sm:$0xf]
      %v915 = vld [vmem:[%s1 + $0x114] sm:$0xf]
      %v916 = vld [vmem:[%s1 + $0x118] sm:$0xf]
      %v917 = vld [vmem:[%s1 + $0x11c] sm:$0xf]
      %v918 = vld [vmem:[%s1 + $0x120] sm:$0xf]
      %v919 = vld [vmem:[%s1 + $0x124] sm:$0xf]
      %v920 = vld [vmem:[%s1 + $0x128] sm:$0xf]
      %v921 = vld [vmem:[%s1 + $0x12c] sm:$0xf]
      %v922 = vld [vmem:[%s1 + $0x130] sm:$0xf]
      %v923 = vld [vmem:[%s1 + $0x134] sm:$0xf]
      %v924 = vld [vmem:[%s1 + $0x138] sm:$0xf]
      %v925 = vld [vmem:[%s1 + $0x13c] sm:$0xf]
      %v926 = vld [vmem:[%s1 + $0x140] sm:$0xf]
      %v927 = vld [vmem:[%s1 + $0x144] sm:$0xf]
      %v928 = vld [vmem:[%s1 + $0x148] sm:$0xf]
      %v929 = vld [vmem:[%s1 + $0x14c] sm:$0xf]
      %v930 = vld [vmem:[%s1 + $0x150] sm:$0xf]
      %v931 = vld [vmem:[%s1 + $0x154] sm:$0xf]
      %v932 = vld [vmem:[%s1 + $0x158] sm:$0xf]
      %v933 = vld [vmem:[%s1 + $0x15c] sm:$0xf]
      %v934 = vld [vmem:[%s1 + $0x160] sm:$0xf]
      %v935 = vld [vmem:[%s1 + $0x164] sm:$0xf]
      %v936 = vld [vmem:[%s1 + $0x168] sm:$0xf]
      %v937 = vld [vmem:[%s1 + $0x16c] sm:$0xf]
      %v938 = vld [vmem:[%s1 + $0x170] sm:$0xf]
      %v939 = vld [vmem:[%s1 + $0x174] sm:$0xf]
      %v940 = vld [vmem:[%s1 + $0x178] sm:$0xf]
      %v941 = vld [vmem:[%s1 + $0x17c] sm:$0xf]
      %v942 = vld [vmem:[%s1 + $0x180] sm:$0xf]
      %v943 = vld [vmem:[%s1 + $0x184] sm:$0xf]
      %v944 = vld [vmem:[%s1 + $0x188] sm:$0xf]
      %v945 = vld [vmem:[%s1 + $0x18c] sm:$0xf]
      %v946 = vld [vmem:[%s1 + $0x190] sm:$0xf]
      %v947 = vld [vmem:[%s1 + $0x194] sm:$0xf]
      %v948 = vld [vmem:[%s1 + $0x198] sm:$0xf]
      %v949 = vld [vmem:[%s1 + $0x19c] sm:$0xf]
      %v950 = vld [vmem:[%s1 + $0x1a0] sm:$0xf]
      %v951 = vld [vmem:[%s1 + $0x1a4] sm:$0xf]
      %v952 = vld [vmem:[%s1 + $0x1a8] sm:$0xf]
      %v953 = vld [vmem:[%s1 + $0x1ac] sm:$0xf]
      %v954 = vld [vmem:[%s1 + $0x1b0] sm:$0xf]
      %v955 = vld [vmem:[%s1 + $0x1b4] sm:$0xf]
      %v956 = vld [vmem:[%s1 + $0x1b8] sm:$0xf]
      %v957 = vld [vmem:[%s1 + $0x1bc] sm:$0xf]
      %v958 = vld [vmem:[%s1 + $0x1c0] sm:$0xf]
      %v959 = vld [vmem:[%s1 + $0x1c4] sm:$0xf]
      %v960 = vld [vmem:[%s1 + $0x1c8] sm:$0xf]
      %v961 = vld [vmem:[%s1 + $0x1cc] sm:$0xf]
      %v962 = vld [vmem:[%s1 + $0x1d0] sm:$0xf]
      %v963 = vld [vmem:[%s1 + $0x1d4] sm:$0xf]
      %v964 = vld [vmem:[%s1 + $0x1d8] sm:$0xf]
      %v965 = vld [vmem:[%s1 + $0x1dc] sm:$0xf]
      %v966 = vld [vmem:[%s1 + $0x1e0] sm:$0xf]
      %v967 = vld [vmem:[%s1 + $0x1e4] sm:$0xf]
      %v968 = vld [vmem:[%s1 + $0x1e8] sm:$0xf]
      %v969 = vld [vmem:[%s1 + $0x1ec] sm:$0xf]
      %v970 = vld [vmem:[%s1 + $0x1f0] sm:$0xf]
      %v971 = vld [vmem:[%s1 + $0x1f4] sm:$0xf]
      %v972 = vld [vmem:[%s1 + $0x1f8] sm:$0xf]
      %v973 = vld [vmem:[%s1 + $0x1fc] sm:$0xf]
      %v974 = vld [vmem:[%s1 + $0x200] sm:$0xf]
      %v975 = vld [vmem:[%s1 + $0x204] sm:$0xf]
      %v976 = vld [vmem:[%s1 + $0x208] sm:$0xf]
      %v977 = vld [vmem:[%s1 + $0x20c] sm:$0xf]
      %v978 = vld [vmem:[%s1 + $0x210] sm:$0xf]
      %v979 = vld [vmem:[%s1 + $0x214] sm:$0xf]
      %v980 = vld [vmem:[%s1 + $0x218] sm:$0xf]
      %v981 = vld [vmem:[%s1 + $0x21c] sm:$0xf]
      %v982 = vld [vmem:[%s1 + $0x220] sm:$0xf]
      %v983 = vld [vmem:[%s1 + $0x224] sm:$0xf]
      %v984 = vld [vmem:[%s1 + $0x228] sm:$0xf]
      %v985 = vld [vmem:[%s1 + $0x22c] sm:$0xf]
      %v986 = vld [vmem:[%s1 + $0x230] sm:$0xf]
      %v987 = vld [vmem:[%s1 + $0x234] sm:$0xf]
      %v988 = vld [vmem:[%s1 + $0x238] sm:$0xf]
      %v989 = vld [vmem:[%s1 + $0x23c] sm:$0xf]
      %v1030 = vunpack.c.l.b16 %v806
      %v1031 = vunpack.c.h.b16 %v806
      %v1032 = vunpack.c.l.b16 %v807
      %v1033 = vunpack.c.h.b16 %v807
      %v1034 = vunpack.c.l.b16 %v808
      %v1035 = vunpack.c.h.b16 %v808
      %v1036 = vunpack.c.l.b16 %v809
      %v1037 = vunpack.c.h.b16 %v809
      %v1038 = vunpack.c.l.b16 %v810
      %v1039 = vunpack.c.l.b16 %v811
      %v1040 = vunpack.c.h.b16 %v811
      %v1041 = vunpack.c.l.b16 %v812
      %v1042 = vunpack.c.h.b16 %v812
      %v1043 = vunpack.c.l.b16 %v813
      %v1044 = vunpack.c.h.b16 %v813
      %v1045 = vunpack.c.l.b16 %v814
      %v1046 = vunpack.c.h.b16 %v814
      %v1047 = vunpack.c.l.b16 %v815
      %v1048 = vunpack.c.l.b16 %v816
      %v1049 = vunpack.c.h.b16 %v816
      %v1050 = vunpack.c.l.b16 %v817
      %v1051 = vunpack.c.h.b16 %v817
      %v1052 = vunpack.c.l.b16 %v818
      %v1053 = vunpack.c.h.b16 %v818
      %v1054 = vunpack.c.l.b16 %v819
      %v1055 = vunpack.c.h.b16 %v819
      %v1056 = vunpack.c.l.b16 %v820
      %v1057 = vunpack.c.l.b16 %v821
      %v1058 = vunpack.c.h.b16 %v821
      %v1059 = vunpack.c.l.b16 %v822
      %v1060 = vunpack.c.h.b16 %v822
      %v1061 = vunpack.c.l.b16 %v823
      %v1062 = vunpack.c.h.b16 %v823
      %v1063 = vunpack.c.l.b16 %v824
      %v1064 = vunpack.c.h.b16 %v824
      %v1065 = vunpack.c.l.b16 %v825
      %v1066 = vunpack.c.l.b16 %v826
      %v1067 = vunpack.c.h.b16 %v826
      %v1068 = vunpack.c.l.b16 %v827
      %v1069 = vunpack.c.h.b16 %v827
      %v1070 = vunpack.c.l.b16 %v828
      %v1071 = vunpack.c.h.b16 %v828
      %v1072 = vunpack.c.l.b16 %v829
      %v1073 = vunpack.c.h.b16 %v829
      %v1074 = vunpack.c.l.b16 %v830
      %v1075 = vunpack.c.l.b16 %v831
      %v1076 = vunpack.c.h.b16 %v831
      %v1077 = vunpack.c.l.b16 %v832
      %v1078 = vunpack.c.h.b16 %v832
      %v1079 = vunpack.c.l.b16 %v833
      %v1080 = vunpack.c.h.b16 %v833
      %v1081 = vunpack.c.l.b16 %v834
      %v1082 = vunpack.c.h.b16 %v834
      %v1083 = vunpack.c.l.b16 %v835
      %v1084 = vunpack.c.l.b16 %v836
      %v1085 = vunpack.c.h.b16 %v836
      %v1086 = vunpack.c.l.b16 %v837
      %v1087 = vunpack.c.h.b16 %v837
      %v1088 = vunpack.c.l.b16 %v838
      %v1089 = vunpack.c.h.b16 %v838
      %v1090 = vunpack.c.l.b16 %v839
      %v1091 = vunpack.c.h.b16 %v839
      %v1092 = vunpack.c.l.b16 %v840
      %v1093 = vunpack.c.l.b16 %v841
      %v1094 = vunpack.c.h.b16 %v841
      %v1095 = vunpack.c.l.b16 %v842
      %v1096 = vunpack.c.h.b16 %v842
      %v1097 = vunpack.c.l.b16 %v843
      %v1098 = vunpack.c.h.b16 %v843
      %v1099 = vunpack.c.l.b16 %v844
      %v1100 = vunpack.c.h.b16 %v844
      %v1101 = vunpack.c.l.b16 %v845
      %v1102 = vpack.c.b16 %v1039, %v1030
      %v1103 = vpack.c.b16 %v1040, %v1031
      %v1104 = vpack.c.b16 %v1041, %v1032
      %v1105 = vpack.c.b16 %v1042, %v1033
      %v1106 = vpack.c.b16 %v1043, %v1034
      %v1107 = vpack.c.b16 %v1044, %v1035
      %v1108 = vpack.c.b16 %v1045, %v1036
      %v1109 = vpack.c.b16 %v1046, %v1037
      %v1110 = vpack.c.b16 %v1047, %v1038
      %v1111 = vpack.c.b16 %v1057, %v1048
      %v1112 = vpack.c.b16 %v1058, %v1049
      %v1113 = vpack.c.b16 %v1059, %v1050
      %v1114 = vpack.c.b16 %v1060, %v1051
      %v1115 = vpack.c.b16 %v1061, %v1052
      %v1116 = vpack.c.b16 %v1062, %v1053
      %v1117 = vpack.c.b16 %v1063, %v1054
      %v1118 = vpack.c.b16 %v1064, %v1055
      %v1119 = vpack.c.b16 %v1065, %v1056
      %v1120 = vpack.c.b16 %v1075, %v1066
      %v1121 = vpack.c.b16 %v1076, %v1067
      %v1122 = vpack.c.b16 %v1077, %v1068
      %v1123 = vpack.c.b16 %v1078, %v1069
      %v1124 = vpack.c.b16 %v1079, %v1070
      %v1125 = vpack.c.b16 %v1080, %v1071
      %v1126 = vpack.c.b16 %v1081, %v1072
      %v1127 = vpack.c.b16 %v1082, %v1073
      %v1128 = vpack.c.b16 %v1083, %v1074
      %v1129 = vpack.c.b16 %v1093, %v1084
      %v1130 = vpack.c.b16 %v1094, %v1085
      %v1131 = vpack.c.b16 %v1095, %v1086
      %v1132 = vpack.c.b16 %v1096, %v1087
      %v1133 = vpack.c.b16 %v1097, %v1088
      %v1134 = vpack.c.b16 %v1098, %v1089
      %v1135 = vpack.c.b16 %v1099, %v1090
      %v1136 = vpack.c.b16 %v1100, %v1091
      %v1137 = vpack.c.b16 %v1101, %v1092
      %v1318 = vunpack.c.l.b16 %v846
      %v1319 = vunpack.c.l.b16 %v847
      %v1320 = vunpack.c.l.b16 %v848
      %v1321 = vunpack.c.l.b16 %v849
      %v1322 = vunpack.c.l.b16 %v850
      %v1323 = vunpack.c.l.b16 %v851
      %v1324 = vunpack.c.l.b16 %v852
      %v1325 = vunpack.c.l.b16 %v853
      %v1326 = vunpack.c.l.b16 %v854
      %v1327 = vunpack.c.l.b16 %v855
      %v1328 = vunpack.c.l.b16 %v856
      %v1329 = vunpack.c.l.b16 %v857
      %v1330 = vunpack.c.l.b16 %v858
      %v1331 = vunpack.c.l.b16 %v859
      %v1332 = vunpack.c.l.b16 %v860
      %v1333 = vunpack.c.l.b16 %v861
      %v1334 = vunpack.c.l.b16 %v862
      %v1335 = vunpack.c.l.b16 %v863
      %v1336 = vunpack.c.l.b16 %v864
      %v1337 = vunpack.c.l.b16 %v865
      %v1338 = vunpack.c.l.b16 %v866
      %v1339 = vunpack.c.l.b16 %v867
      %v1340 = vunpack.c.l.b16 %v868
      %v1341 = vunpack.c.l.b16 %v869
      %v1342 = vunpack.c.l.b16 %v870
      %v1343 = vunpack.c.l.b16 %v871
      %v1344 = vunpack.c.l.b16 %v872
      %v1345 = vunpack.c.l.b16 %v873
      %v1346 = vunpack.c.l.b16 %v874
      %v1347 = vunpack.c.l.b16 %v875
      %v1348 = vunpack.c.l.b16 %v876
      %v1349 = vunpack.c.l.b16 %v877
      %v1350 = vunpack.c.l.b16 %v878
      %v1351 = vunpack.c.l.b16 %v879
      %v1352 = vunpack.c.l.b16 %v880
      %v1353 = vunpack.c.l.b16 %v881
      %v1354 = vunpack.c.l.b16 %v882
      %v1355 = vunpack.c.l.b16 %v883
      %v1356 = vunpack.c.l.b16 %v884
      %v1357 = vunpack.c.l.b16 %v885
      %v1358 = vunpack.c.l.b16 %v886
      %v1359 = vunpack.c.l.b16 %v887
      %v1360 = vunpack.c.l.b16 %v888
      %v1361 = vunpack.c.l.b16 %v889
      %v1362 = vunpack.c.l.b16 %v890
      %v1363 = vunpack.c.l.b16 %v891
      %v1364 = vunpack.c.l.b16 %v892
      %v1365 = vunpack.c.l.b16 %v893
      %v1366 = vunpack.c.l.b16 %v894
      %v1367 = vunpack.c.l.b16 %v895
      %v1368 = vunpack.c.l.b16 %v896
      %v1369 = vunpack.c.l.b16 %v897
      %v1370 = vunpack.c.l.b16 %v898
      %v1371 = vunpack.c.l.b16 %v899
      %v1372 = vunpack.c.l.b16 %v900
      %v1373 = vunpack.c.l.b16 %v901
      %v1374 = vunpack.c.l.b16 %v902
      %v1375 = vunpack.c.l.b16 %v903
      %v1376 = vunpack.c.l.b16 %v904
      %v1377 = vunpack.c.l.b16 %v905
      %v1378 = vunpack.c.l.b16 %v906
      %v1379 = vunpack.c.l.b16 %v907
      %v1380 = vunpack.c.l.b16 %v908
      %v1381 = vunpack.c.l.b16 %v909
      %v1382 = vunpack.c.l.b16 %v910
      %v1383 = vunpack.c.l.b16 %v911
      %v1384 = vunpack.c.l.b16 %v912
      %v1385 = vunpack.c.l.b16 %v913
      %v1386 = vunpack.c.l.b16 %v914
      %v1387 = vunpack.c.l.b16 %v915
      %v1388 = vunpack.c.l.b16 %v916
      %v1389 = vunpack.c.l.b16 %v917
      %v1390 = vunpack.c.l.b16 %v918
      %v1391 = vunpack.c.l.b16 %v919
      %v1392 = vunpack.c.l.b16 %v920
      %v1393 = vunpack.c.l.b16 %v921
      %v1394 = vunpack.c.l.b16 %v922
      %v1395 = vunpack.c.l.b16 %v923
      %v1396 = vunpack.c.l.b16 %v924
      %v1397 = vunpack.c.l.b16 %v925
      %v1398 = vunpack.c.l.b16 %v926
      %v1399 = vunpack.c.l.b16 %v927
      %v1400 = vunpack.c.l.b16 %v928
      %v1401 = vunpack.c.l.b16 %v929
      %v1402 = vunpack.c.l.b16 %v930
      %v1403 = vunpack.c.l.b16 %v931
      %v1404 = vunpack.c.l.b16 %v932
      %v1405 = vunpack.c.l.b16 %v933
      %v1406 = vunpack.c.l.b16 %v934
      %v1407 = vunpack.c.l.b16 %v935
      %v1408 = vunpack.c.l.b16 %v936
      %v1409 = vunpack.c.l.b16 %v937
      %v1410 = vunpack.c.l.b16 %v938
      %v1411 = vunpack.c.l.b16 %v939
      %v1412 = vunpack.c.l.b16 %v940
      %v1413 = vunpack.c.l.b16 %v941
      %v1414 = vunpack.c.l.b16 %v942
      %v1415 = vunpack.c.l.b16 %v943
      %v1416 = vunpack.c.l.b16 %v944
      %v1417 = vunpack.c.l.b16 %v945
      %v1418 = vunpack.c.l.b16 %v946
      %v1419 = vunpack.c.l.b16 %v947
      %v1420 = vunpack.c.l.b16 %v948
      %v1421 = vunpack.c.l.b16 %v949
      %v1422 = vunpack.c.l.b16 %v950
      %v1423 = vunpack.c.l.b16 %v951
      %v1424 = vunpack.c.l.b16 %v952
      %v1425 = vunpack.c.l.b16 %v953
      %v1426 = vunpack.c.l.b16 %v954
      %v1427 = vunpack.c.l.b16 %v955
      %v1428 = vunpack.c.l.b16 %v956
      %v1429 = vunpack.c.l.b16 %v957
      %v1430 = vunpack.c.l.b16 %v958
      %v1431 = vunpack.c.l.b16 %v959
      %v1432 = vunpack.c.l.b16 %v960
      %v1433 = vunpack.c.l.b16 %v961
      %v1434 = vunpack.c.l.b16 %v962
      %v1435 = vunpack.c.l.b16 %v963
      %v1436 = vunpack.c.l.b16 %v964
      %v1437 = vunpack.c.l.b16 %v965
      %v1438 = vunpack.c.l.b16 %v966
      %v1439 = vunpack.c.l.b16 %v967
      %v1440 = vunpack.c.l.b16 %v968
      %v1441 = vunpack.c.l.b16 %v969
      %v1442 = vunpack.c.l.b16 %v970
      %v1443 = vunpack.c.l.b16 %v971
      %v1444 = vunpack.c.l.b16 %v972
      %v1445 = vunpack.c.l.b16 %v973
      %v1446 = vunpack.c.l.b16 %v974
      %v1447 = vunpack.c.l.b16 %v975
      %v1448 = vunpack.c.l.b16 %v976
      %v1449 = vunpack.c.l.b16 %v977
      %v1450 = vunpack.c.l.b16 %v978
      %v1451 = vunpack.c.l.b16 %v979
      %v1452 = vunpack.c.l.b16 %v980
      %v1453 = vunpack.c.l.b16 %v981
      %v1454 = vunpack.c.l.b16 %v982
      %v1455 = vunpack.c.l.b16 %v983
      %v1456 = vunpack.c.l.b16 %v984
      %v1457 = vunpack.c.l.b16 %v985
      %v1458 = vunpack.c.l.b16 %v986
      %v1459 = vunpack.c.l.b16 %v987
      %v1460 = vunpack.c.l.b16 %v988
      %v1461 = vunpack.c.l.b16 %v989
      %v1462 = vpack.c.b16 %v1319, %v1318
      %v1463 = vpack.c.b16 %v1321, %v1320
      %v1464 = vpack.c.b16 %v1323, %v1322
      %v1465 = vpack.c.b16 %v1325, %v1324
      %v1466 = vpack.c.b16 %v1327, %v1326
      %v1467 = vpack.c.b16 %v1329, %v1328
      %v1468 = vpack.c.b16 %v1331, %v1330
      %v1469 = vpack.c.b16 %v1333, %v1332
      %v1470 = vpack.c.b16 %v1335, %v1334
      %v1471 = vpack.c.b16 %v1337, %v1336
      %v1472 = vpack.c.b16 %v1339, %v1338
      %v1473 = vpack.c.b16 %v1341, %v1340
      %v1474 = vpack.c.b16 %v1343, %v1342
      %v1475 = vpack.c.b16 %v1345, %v1344
      %v1476 = vpack.c.b16 %v1347, %v1346
      %v1477 = vpack.c.b16 %v1349, %v1348
      %v1478 = vpack.c.b16 %v1351, %v1350
      %v1479 = vpack.c.b16 %v1353, %v1352
      %v1480 = vpack.c.b16 %v1355, %v1354
      %v1481 = vpack.c.b16 %v1357, %v1356
      %v1482 = vpack.c.b16 %v1359, %v1358
      %v1483 = vpack.c.b16 %v1361, %v1360
      %v1484 = vpack.c.b16 %v1363, %v1362
      %v1485 = vpack.c.b16 %v1365, %v1364
      %v1486 = vpack.c.b16 %v1367, %v1366
      %v1487 = vpack.c.b16 %v1369, %v1368
      %v1488 = vpack.c.b16 %v1371, %v1370
      %v1489 = vpack.c.b16 %v1373, %v1372
      %v1490 = vpack.c.b16 %v1375, %v1374
      %v1491 = vpack.c.b16 %v1377, %v1376
      %v1492 = vpack.c.b16 %v1379, %v1378
      %v1493 = vpack.c.b16 %v1381, %v1380
      %v1494 = vpack.c.b16 %v1383, %v1382
      %v1495 = vpack.c.b16 %v1385, %v1384
      %v1496 = vpack.c.b16 %v1387, %v1386
      %v1497 = vpack.c.b16 %v1389, %v1388
      %v1498 = vpack.c.b16 %v1391, %v1390
      %v1499 = vpack.c.b16 %v1393, %v1392
      %v1500 = vpack.c.b16 %v1395, %v1394
      %v1501 = vpack.c.b16 %v1397, %v1396
      %v1502 = vpack.c.b16 %v1399, %v1398
      %v1503 = vpack.c.b16 %v1401, %v1400
      %v1504 = vpack.c.b16 %v1403, %v1402
      %v1505 = vpack.c.b16 %v1405, %v1404
      %v1506 = vpack.c.b16 %v1407, %v1406
      %v1507 = vpack.c.b16 %v1409, %v1408
      %v1508 = vpack.c.b16 %v1411, %v1410
      %v1509 = vpack.c.b16 %v1413, %v1412
      %v1510 = vpack.c.b16 %v1415, %v1414
      %v1511 = vpack.c.b16 %v1417, %v1416
      %v1512 = vpack.c.b16 %v1419, %v1418
      %v1513 = vpack.c.b16 %v1421, %v1420
      %v1514 = vpack.c.b16 %v1423, %v1422
      %v1515 = vpack.c.b16 %v1425, %v1424
      %v1516 = vpack.c.b16 %v1427, %v1426
      %v1517 = vpack.c.b16 %v1429, %v1428
      %v1518 = vpack.c.b16 %v1431, %v1430
      %v1519 = vpack.c.b16 %v1433, %v1432
      %v1520 = vpack.c.b16 %v1435, %v1434
      %v1521 = vpack.c.b16 %v1437, %v1436
      %v1522 = vpack.c.b16 %v1439, %v1438
      %v1523 = vpack.c.b16 %v1441, %v1440
      %v1524 = vpack.c.b16 %v1443, %v1442
      %v1525 = vpack.c.b16 %v1445, %v1444
      %v1526 = vpack.c.b16 %v1447, %v1446
      %v1527 = vpack.c.b16 %v1449, %v1448
      %v1528 = vpack.c.b16 %v1451, %v1450
      %v1529 = vpack.c.b16 %v1453, %v1452
      %v1530 = vpack.c.b16 %v1455, %v1454
      %v1531 = vpack.c.b16 %v1457, %v1456
      %v1532 = vpack.c.b16 %v1459, %v1458
      %v1533 = vpack.c.b16 %v1461, %v1460
      %1606 = vmatprep.subr.bf16.mxu0 0
      %1607 = vmatpush1.bf16.msra.mxu0 %v1469
      %1608 = vmatprep.subr.bf16.mxu0 0
      %1609 = vmatpush1.bf16.msra.mxu0 %v1468
      %1610 = vmatprep.subr.bf16.mxu0 0
      %1611 = vmatpush1.bf16.msra.mxu0 %v1467
      %1612 = vmatprep.subr.bf16.mxu0 0
      %1613 = vmatpush1.bf16.msra.mxu0 %v1466
      %1614 = vmatprep.subr.bf16.mxu0 0
      %1615 = vmatpush1.bf16.msra.mxu0 %v1465
      %1616 = vmatprep.subr.bf16.mxu0 0
      %1617 = vmatpush1.bf16.msra.mxu0 %v1464
      %1618 = vmatprep.subr.bf16.mxu0 0
      %1619 = vmatpush1.bf16.msra.mxu0 %v1463
      %1620 = vmatprep.subr.bf16.mxu0 0
      %1621 = vmatpush1.bf16.msra.mxu0 %v1462
      %1622 = vmatprep.subr.bf16.mxu0 0
      %1623 = vmatpush2.bf16.msra.mxu0 %v1477
      %1624 = vmatprep.subr.bf16.mxu0 0
      %1625 = vmatpush2.bf16.msra.mxu0 %v1476
      %1626 = vmatprep.subr.bf16.mxu0 0
      %1627 = vmatpush2.bf16.msra.mxu0 %v1475
      %1628 = vmatprep.subr.bf16.mxu0 0
      %1629 = vmatpush2.bf16.msra.mxu0 %v1474
      %1630 = vmatprep.subr.bf16.mxu0 0
      %1631 = vmatpush2.bf16.msra.mxu0 %v1473
      %1632 = vmatprep.subr.bf16.mxu0 0
      %1633 = vmatpush2.bf16.msra.mxu0 %v1472
      %1634 = vmatprep.subr.bf16.mxu0 0
      %1635 = vmatpush2.bf16.msra.mxu0 %v1471
      %1636 = vmatprep.subr.bf16.mxu0 0
      %1637 = vmatpush2.bf16.msra.mxu0 %v1470
      %1638 = vmatprep.mubr.bf16.mxu0 %v1103
      %1639 = vmatmul.mubr.bf16.gmra.mxu0 %v1102
      %v1640 = vpop.f32.mrf.mxu0
      %v1641 = vadd.f32 0.0, %v1640
      %v1642 = vpop.f32.mrf.mxu0
      %v1643 = vpop.f32.mrf.mxu0
      %v1644 = vadd.f32 0.0, %v1643
      %v1645 = vpop.f32.mrf.mxu0
      %1646 = vmatprep.mubr.bf16.mxu0 %v1112
      %1647 = vmatmul.mubr.bf16.gmra.mxu0 %v1111
      %v1648 = vpop.f32.mrf.mxu0
      %v1649 = vadd.f32 0.0, %v1648
      %v1650 = vpop.f32.mrf.mxu0
      %v1651 = vpop.f32.mrf.mxu0
      %v1652 = vadd.f32 0.0, %v1651
      %v1653 = vpop.f32.mrf.mxu0
      %1654 = vmatprep.mubr.bf16.mxu0 %v1121
      %1655 = vmatmul.mubr.bf16.gmra.mxu0 %v1120
      %v1656 = vpop.f32.mrf.mxu0
      %v1657 = vadd.f32 0.0, %v1656
      %v1658 = vpop.f32.mrf.mxu0
      %v1659 = vpop.f32.mrf.mxu0
      %v1660 = vadd.f32 0.0, %v1659
      %v1661 = vpop.f32.mrf.mxu0
      %1662 = vmatprep.mubr.bf16.mxu0 %v1130
      %1663 = vmatmul.mubr.bf16.gmra.mxu0 %v1129
      %v1664 = vpop.f32.mrf.mxu0
      %v1665 = vadd.f32 0.0, %v1664
      %v1666 = vpop.f32.mrf.mxu0
      %v1667 = vpop.f32.mrf.mxu0
      %v1668 = vadd.f32 0.0, %v1667
      %v1669 = vpop.f32.mrf.mxu0
      %1670 = vdwg.mxu0
      %1671 = vmatprep.subr.bf16.mxu0 0
      %1672 = vmatpush1.bf16.msra.mxu0 %v1485
      %1673 = vmatprep.subr.bf16.mxu0 0
      %1674 = vmatpush1.bf16.msra.mxu0 %v1484
      %1675 = vmatprep.subr.bf16.mxu0 0
      %1676 = vmatpush1.bf16.msra.mxu0 %v1483
      %1677 = vmatprep.subr.bf16.mxu0 0
      %1678 = vmatpush1.bf16.msra.mxu0 %v1482
      %1679 = vmatprep.subr.bf16.mxu0 0
      %1680 = vmatpush1.bf16.msra.mxu0 %v1481
      %1681 = vmatprep.subr.bf16.mxu0 0
      %1682 = vmatpush1.bf16.msra.mxu0 %v1480
      %1683 = vmatprep.subr.bf16.mxu0 0
      %1684 = vmatpush1.bf16.msra.mxu0 %v1479
      %1685 = vmatprep.subr.bf16.mxu0 0
      %1686 = vmatpush1.bf16.msra.mxu0 %v1478
      %1687 = vmatprep.subr.bf16.mxu0 0
      %1688 = vmatpush2.bf16.msra.mxu0 %v1493
      %1689 = vmatprep.subr.bf16.mxu0 0
      %1690 = vmatpush2.bf16.msra.mxu0 %v1492
      %1691 = vmatprep.subr.bf16.mxu0 0
      %1692 = vmatpush2.bf16.msra.mxu0 %v1491
      %1693 = vmatprep.subr.bf16.mxu0 0
      %1694 = vmatpush2.bf16.msra.mxu0 %v1490
      %1695 = vmatprep.subr.bf16.mxu0 0
      %1696 = vmatpush2.bf16.msra.mxu0 %v1489
      %1697 = vmatprep.subr.bf16.mxu0 0
      %1698 = vmatpush2.bf16.msra.mxu0 %v1488
      %1699 = vmatprep.subr.bf16.mxu0 0
      %1700 = vmatpush2.bf16.msra.mxu0 %v1487
      %1701 = vmatprep.subr.bf16.mxu0 0
      %1702 = vmatpush2.bf16.msra.mxu0 %v1486
      %1703 = vmatprep.mubr.bf16.mxu0 %v1105
      %1704 = vmatmul.mubr.bf16.gmra.mxu0 %v1104
      %v1705 = vpop.f32.mrf.mxu0
      %v1706 = vadd.f32 %v1641, %v1705
      %v1707 = vpop.f32.mrf.mxu0
      %v1708 = vpop.f32.mrf.mxu0
      %v1709 = vadd.f32 %v1644, %v1708
      %v1710 = vpop.f32.mrf.mxu0
      %1711 = vmatprep.mubr.bf16.mxu0 %v1114
      %1712 = vmatmul.mubr.bf16.gmra.mxu0 %v1113
      %v1713 = vpop.f32.mrf.mxu0
      %v1714 = vadd.f32 %v1649, %v1713
      %v1715 = vpop.f32.mrf.mxu0
      %v1716 = vpop.f32.mrf.mxu0
      %v1717 = vadd.f32 %v1652, %v1716
      %v1718 = vpop.f32.mrf.mxu0
      %1719 = vmatprep.mubr.bf16.mxu0 %v1123
      %1720 = vmatmul.mubr.bf16.gmra.mxu0 %v1122
      %v1721 = vpop.f32.mrf.mxu0
      %v1722 = vadd.f32 %v1657, %v1721
      %v1723 = vpop.f32.mrf.mxu0
      %v1724 = vpop.f32.mrf.mxu0
      %v1725 = vadd.f32 %v1660, %v1724
      %v1726 = vpop.f32.mrf.mxu0
      %1727 = vmatprep.mubr.bf16.mxu0 %v1132
      %1728 = vmatmul.mubr.bf16.gmra.mxu0 %v1131
      %v1729 = vpop.f32.mrf.mxu0
      %v1730 = vadd.f32 %v1665, %v1729
      %v1731 = vpop.f32.mrf.mxu0
      %v1732 = vpop.f32.mrf.mxu0
      %v1733 = vadd.f32 %v1668, %v1732
      %v1734 = vpop.f32.mrf.mxu0
      %1735 = vdwg.mxu0
      %1736 = vmatprep.subr.bf16.mxu0 0
      %1737 = vmatpush1.bf16.msra.mxu0 %v1501
      %1738 = vmatprep.subr.bf16.mxu0 0
      %1739 = vmatpush1.bf16.msra.mxu0 %v1500
      %1740 = vmatprep.subr.bf16.mxu0 0
      %1741 = vmatpush1.bf16.msra.mxu0 %v1499
      %1742 = vmatprep.subr.bf16.mxu0 0
      %1743 = vmatpush1.bf16.msra.mxu0 %v1498
      %1744 = vmatprep.subr.bf16.mxu0 0
      %1745 = vmatpush1.bf16.msra.mxu0 %v1497
      %1746 = vmatprep.subr.bf16.mxu0 0
      %1747 = vmatpush1.bf16.msra.mxu0 %v1496
      %1748 = vmatprep.subr.bf16.mxu0 0
      %1749 = vmatpush1.bf16.msra.mxu0 %v1495
      %1750 = vmatprep.subr.bf16.mxu0 0
      %1751 = vmatpush1.bf16.msra.mxu0 %v1494
      %1752 = vmatprep.subr.bf16.mxu0 0
      %1753 = vmatpush2.bf16.msra.mxu0 %v1509
      %1754 = vmatprep.subr.bf16.mxu0 0
      %1755 = vmatpush2.bf16.msra.mxu0 %v1508
      %1756 = vmatprep.subr.bf16.mxu0 0
      %1757 = vmatpush2.bf16.msra.mxu0 %v1507
      %1758 = vmatprep.subr.bf16.mxu0 0
      %1759 = vmatpush2.bf16.msra.mxu0 %v1506
      %1760 = vmatprep.subr.bf16.mxu0 0
      %1761 = vmatpush2.bf16.msra.mxu0 %v1505
      %1762 = vmatprep.subr.bf16.mxu0 0
      %1763 = vmatpush2.bf16.msra.mxu0 %v1504
      %1764 = vmatprep.subr.bf16.mxu0 0
      %1765 = vmatpush2.bf16.msra.mxu0 %v1503
      %1766 = vmatprep.subr.bf16.mxu0 0
      %1767 = vmatpush2.bf16.msra.mxu0 %v1502
      %1768 = vmatprep.mubr.bf16.mxu0 %v1107
      %1769 = vmatmul.mubr.bf16.gmra.mxu0 %v1106
      %v1770 = vpop.f32.mrf.mxu0
      %v1771 = vadd.f32 %v1706, %v1770
      %v1772 = vpop.f32.mrf.mxu0
      %v1773 = vpop.f32.mrf.mxu0
      %v1774 = vadd.f32 %v1709, %v1773
      %v1775 = vpop.f32.mrf.mxu0
      %1776 = vmatprep.mubr.bf16.mxu0 %v1116
      %1777 = vmatmul.mubr.bf16.gmra.mxu0 %v1115
      %v1778 = vpop.f32.mrf.mxu0
      %v1779 = vadd.f32 %v1714, %v1778
      %v1780 = vpop.f32.mrf.mxu0
      %v1781 = vpop.f32.mrf.mxu0
      %v1782 = vadd.f32 %v1717, %v1781
      %v1783 = vpop.f32.mrf.mxu0
      %1784 = vmatprep.mubr.bf16.mxu0 %v1125
      %1785 = vmatmul.mubr.bf16.gmra.mxu0 %v1124
      %v1786 = vpop.f32.mrf.mxu0
      %v1787 = vadd.f32 %v1722, %v1786
      %v1788 = vpop.f32.mrf.mxu0
      %v1789 = vpop.f32.mrf.mxu0
      %v1790 = vadd.f32 %v1725, %v1789
      %v1791 = vpop.f32.mrf.mxu0
      %1792 = vmatprep.mubr.bf16.mxu0 %v1134
      %1793 = vmatmul.mubr.bf16.gmra.mxu0 %v1133
      %v1794 = vpop.f32.mrf.mxu0
      %v1795 = vadd.f32 %v1730, %v1794
      %v1796 = vpop.f32.mrf.mxu0
      %v1797 = vpop.f32.mrf.mxu0
      %v1798 = vadd.f32 %v1733, %v1797
      %v1799 = vpop.f32.mrf.mxu0
      %1800 = vdwg.mxu0
      %1801 = vmatprep.subr.bf16.mxu0 0
      %1802 = vmatpush1.bf16.msra.mxu0 %v1517
      %1803 = vmatprep.subr.bf16.mxu0 0
      %1804 = vmatpush1.bf16.msra.mxu0 %v1516
      %1805 = vmatprep.subr.bf16.mxu0 0
      %1806 = vmatpush1.bf16.msra.mxu0 %v1515
      %1807 = vmatprep.subr.bf16.mxu0 0
      %1808 = vmatpush1.bf16.msra.mxu0 %v1514
      %1809 = vmatprep.subr.bf16.mxu0 0
      %1810 = vmatpush1.bf16.msra.mxu0 %v1513
      %1811 = vmatprep.subr.bf16.mxu0 0
      %1812 = vmatpush1.bf16.msra.mxu0 %v1512
      %1813 = vmatprep.subr.bf16.mxu0 0
      %1814 = vmatpush1.bf16.msra.mxu0 %v1511
      %1815 = vmatprep.subr.bf16.mxu0 0
      %1816 = vmatpush1.bf16.msra.mxu0 %v1510
      %1817 = vmatprep.subr.bf16.mxu0 0
      %1818 = vmatpush2.bf16.msra.mxu0 %v1525
      %1819 = vmatprep.subr.bf16.mxu0 0
      %1820 = vmatpush2.bf16.msra.mxu0 %v1524
      %1821 = vmatprep.subr.bf16.mxu0 0
      %1822 = vmatpush2.bf16.msra.mxu0 %v1523
      %1823 = vmatprep.subr.bf16.mxu0 0
      %1824 = vmatpush2.bf16.msra.mxu0 %v1522
      %1825 = vmatprep.subr.bf16.mxu0 0
      %1826 = vmatpush2.bf16.msra.mxu0 %v1521
      %1827 = vmatprep.subr.bf16.mxu0 0
      %1828 = vmatpush2.bf16.msra.mxu0 %v1520
      %1829 = vmatprep.subr.bf16.mxu0 0
      %1830 = vmatpush2.bf16.msra.mxu0 %v1519
      %1831 = vmatprep.subr.bf16.mxu0 0
      %1832 = vmatpush2.bf16.msra.mxu0 %v1518
      %1833 = vmatprep.mubr.bf16.mxu0 %v1109
      %1834 = vmatmul.mubr.bf16.gmra.mxu0 %v1108
      %v1835 = vpop.f32.mrf.mxu0
      %v1836 = vadd.f32 %v1771, %v1835
      %v1837 = vpop.f32.mrf.mxu0
      %v1838 = vpop.f32.mrf.mxu0
      %v1839 = vadd.f32 %v1774, %v1838
      %v1840 = vpop.f32.mrf.mxu0
      %1841 = vmatprep.mubr.bf16.mxu0 %v1118
      %1842 = vmatmul.mubr.bf16.gmra.mxu0 %v1117
      %v1843 = vpop.f32.mrf.mxu0
      %v1844 = vadd.f32 %v1779, %v1843
      %v1845 = vpop.f32.mrf.mxu0
      %v1846 = vpop.f32.mrf.mxu0
      %v1847 = vadd.f32 %v1782, %v1846
      %v1848 = vpop.f32.mrf.mxu0
      %1849 = vmatprep.mubr.bf16.mxu0 %v1127
      %1850 = vmatmul.mubr.bf16.gmra.mxu0 %v1126
      %v1851 = vpop.f32.mrf.mxu0
      %v1852 = vadd.f32 %v1787, %v1851
      %v1853 = vpop.f32.mrf.mxu0
      %v1854 = vpop.f32.mrf.mxu0
      %v1855 = vadd.f32 %v1790, %v1854
      %v1856 = vpop.f32.mrf.mxu0
      %1857 = vmatprep.mubr.bf16.mxu0 %v1136
      %1858 = vmatmul.mubr.bf16.gmra.mxu0 %v1135
      %v1859 = vpop.f32.mrf.mxu0
      %v1860 = vadd.f32 %v1795, %v1859
      %v1861 = vpop.f32.mrf.mxu0
      %v1862 = vpop.f32.mrf.mxu0
      %v1863 = vadd.f32 %v1798, %v1862
      %v1864 = vpop.f32.mrf.mxu0
      %1865 = vdwg.mxu0
      %1866 = vmatprep.subr.bf16.mxu0 0
      %1867 = vmatpush1.bf16.msra.mxu0 %v1533
      %1868 = vmatprep.subr.bf16.mxu0 0
      %1869 = vmatpush1.bf16.msra.mxu0 %v1532
      %1870 = vmatprep.subr.bf16.mxu0 0
      %1871 = vmatpush1.bf16.msra.mxu0 %v1531
      %1872 = vmatprep.subr.bf16.mxu0 0
      %1873 = vmatpush1.bf16.msra.mxu0 %v1530
      %1874 = vmatprep.subr.bf16.mxu0 0
      %1875 = vmatpush1.bf16.msra.mxu0 %v1529
      %1876 = vmatprep.subr.bf16.mxu0 0
      %1877 = vmatpush1.bf16.msra.mxu0 %v1528
      %1878 = vmatprep.subr.bf16.mxu0 0
      %1879 = vmatpush1.bf16.msra.mxu0 %v1527
      %1880 = vmatprep.subr.bf16.mxu0 0
      %1881 = vmatpush1.bf16.msra.mxu0 %v1526
      %1882 = vmatprep.subr.bf16.mxu0 0
      %1883 = vmatpush2.bf16.msra.mxu0 0
      %1884 = vmatprep.subr.bf16.mxu0 0
      %1885 = vmatpush2.bf16.msra.mxu0 0
      %1886 = vmatprep.subr.bf16.mxu0 0
      %1887 = vmatpush2.bf16.msra.mxu0 0
      %1888 = vmatprep.subr.bf16.mxu0 0
      %1889 = vmatpush2.bf16.msra.mxu0 0
      %1890 = vmatprep.subr.bf16.mxu0 0
      %1891 = vmatpush2.bf16.msra.mxu0 0
      %1892 = vmatprep.subr.bf16.mxu0 0
      %1893 = vmatpush2.bf16.msra.mxu0 0
      %1894 = vmatprep.subr.bf16.mxu0 0
      %1895 = vmatpush2.bf16.msra.mxu0 0
      %1896 = vmatprep.subr.bf16.mxu0 0
      %1897 = vmatpush2.bf16.msra.mxu0 0
      %1898 = vmatprep.mubr.bf16.mxu0 0
      %1899 = vmatmul.mubr.bf16.gmra.mxu0 %v1110
      %v1900 = vpop.f32.mrf.mxu0
      %v1901 = vadd.f32 %v1836, %v1900
      %v1902 = vpop.f32.mrf.mxu0
      %v1903 = vpop.f32.mrf.mxu0
      %v1904 = vadd.f32 %v1839, %v1903
      %v1905 = vpop.f32.mrf.mxu0
      %1906 = vmatprep.mubr.bf16.mxu0 0
      %1907 = vmatmul.mubr.bf16.gmra.mxu0 %v1119
      %v1908 = vpop.f32.mrf.mxu0
      %v1909 = vadd.f32 %v1844, %v1908
      %v1910 = vpop.f32.mrf.mxu0
      %v1911 = vpop.f32.mrf.mxu0
      %v1912 = vadd.f32 %v1847, %v1911
      %v1913 = vpop.f32.mrf.mxu0
      %1914 = vmatprep.mubr.bf16.mxu0 0
      %1915 = vmatmul.mubr.bf16.gmra.mxu0 %v1128
      %v1916 = vpop.f32.mrf.mxu0
      %v1917 = vadd.f32 %v1852, %v1916
      %v1918 = vpop.f32.mrf.mxu0
      %v1919 = vpop.f32.mrf.mxu0
      %v1920 = vadd.f32 %v1855, %v1919
      %v1921 = vpop.f32.mrf.mxu0
      %1922 = vmatprep.mubr.bf16.mxu0 0
      %1923 = vmatmul.mubr.bf16.gmra.mxu0 %v1137
      %v1924 = vpop.f32.mrf.mxu0
      %v1925 = vadd.f32 %v1860, %v1924
      %v1926 = vpop.f32.mrf.mxu0
      %v1927 = vpop.f32.mrf.mxu0
      %v1928 = vadd.f32 %v1863, %v1927
      %v1929 = vpop.f32.mrf.mxu0
      %1930 = vdwg.mxu0
      %v1931 = vadd.f32 %v1901, %v1904
      %v1932 = vadd.f32 %v1931, %v1909
      %v1933 = vadd.f32 %v1932, %v1912
      %v1934 = vadd.f32 %v1933, %v1917
      %v1935 = vadd.f32 %v1934, %v1920
      %v1936 = vadd.f32 %v1935, %v1925
      %v1937 = vadd.f32 %v1936, %v1928
      %v1938 = vrot.slane %v1937, 4
      %v1939 = vadd.f32 %v1937, %v1938
      %v1940 = vrot.slane %v1939, 2
      %v1941 = vadd.f32 %v1939, %v1940
      %v1942 = vrot.slane %v1941, 1
      %v1943 = vadd.f32 %v1941, %v1942
      %1944 = vst [vmem:[%s211] sm:$0x1] %v1943
      %v1945 = vmul.f32 %v1901, %v1901
      %v1946 = vmul.f32 %v1904, %v1904
      %v1947 = vmul.f32 %v1909, %v1909
      %v1948 = vmul.f32 %v1912, %v1912
      %v1949 = vmul.f32 %v1917, %v1917
      %v1950 = vmul.f32 %v1920, %v1920
      %v1951 = vmul.f32 %v1925, %v1925
      %v1952 = vmul.f32 %v1928, %v1928
      %v1953 = vadd.f32 %v1945, %v1946
      %v1954 = vadd.f32 %v1953, %v1947
      %v1955 = vadd.f32 %v1954, %v1948
      %v1956 = vadd.f32 %v1955, %v1949
      %v1957 = vadd.f32 %v1956, %v1950
      %v1958 = vadd.f32 %v1957, %v1951
      %v1959 = vadd.f32 %v1958, %v1952
      %v1960 = vrot.slane %v1959, 4
      %v1961 = vadd.f32 %v1959, %v1960
      %v1962 = vrot.slane %v1961, 2
      %v1963 = vadd.f32 %v1961, %v1962
      %v1964 = vrot.slane %v1963, 1
      %v1965 = vadd.f32 %v1963, %v1964
      %1966 = vst [vmem:[%s214] sm:$0x1] %v1965
      %v1967 = vpack.c.bf16 %v1904, %v1901
      %v1968 = vpack.c.bf16 %v1912, %v1909
      %v1969 = vpack.c.bf16 %v1920, %v1917
      %v1970 = vpack.c.bf16 %v1928, %v1925
      %v1975 = vunpack.c.l.b16 %v1967
      %v1976 = vunpack.c.h.b16 %v1967
      %v1977 = vunpack.c.l.b16 %v1968
      %v1978 = vunpack.c.h.b16 %v1968
      %v1979 = vunpack.c.l.b16 %v1969
      %v1980 = vunpack.c.h.b16 %v1969
      %v1981 = vunpack.c.l.b16 %v1970
      %v1982 = vunpack.c.h.b16 %v1970
      %v1983 = vpack.c.b16 %v1975, %v1975
      %v1984 = vpack.c.b16 %v1976, %v1976
      %v1985 = vpack.c.b16 %v1977, %v1977
      %v1986 = vpack.c.b16 %v1978, %v1978
      %v1987 = vpack.c.b16 %v1979, %v1979
      %v1988 = vpack.c.b16 %v1980, %v1980
      %v1989 = vpack.c.b16 %v1981, %v1981
      %v1990 = vpack.c.b16 %v1982, %v1982
      %1999 = vst [vmem:[%s208] sm:$0xf] %v1983
      %2000 = vst [vmem:[%s208 + $0x4] sm:$0xf] %v1984
      %2001 = vst [vmem:[%s208 + $0x8] sm:$0xf] %v1985
      %2002 = vst [vmem:[%s208 + $0xc] sm:$0xf] %v1986
      %2003 = vst [vmem:[%s208 + $0x10] sm:$0xf] %v1987
      %2004 = vst [vmem:[%s208 + $0x14] sm:$0xf] %v1988
      %2005 = vst [vmem:[%s208 + $0x18] sm:$0xf] %v1989
      %2006 = vst [vmem:[%s208 + $0x1c] sm:$0xf] %v1990
      %p2007 = scmp.lt.s32.totalorder %s16, 1
      %s2008 = scalar_select %p2007, %s16, 1
      %s2009 = smul.addr %s2008, 8
      %s2010 = smul.addr %s2009, 4
      %s2011 = scalar_lea.vmem %s2, %s2010
      %p2012 = scmp.lt.s32.totalorder %s16, 1
      %s2013 = scalar_select %p2012, %s16, 1
      %s2014 = scalar_lea.vmem %s3, %s2013
      %p2015 = scmp.lt.s32.totalorder %s16, 1
      %s2016 = scalar_select %p2015, %s16, 1
      %s2017 = scalar_lea.vmem %s4, %s2016
      // Predicated region
      $region29: #{_unnamed_function_.2} parent=27 // pred_check
        %p2018 = pneg %p81
      $region30: #{_unnamed_function_.2} parent=27 // pred_check_branch
        %2020 = sbr.rel (%p2018) target = $region32
      $region31: #{_unnamed_function_.2} parent=27 // pred_region
        _
      $region32: #{_unnamed_function_.2} parent=27 // pred_fallthru
        _
      // Predicated region
      $region33: #{_unnamed_function_.2} parent=27 // pred_check
        %p2021 = pneg %p107
      $region34: #{_unnamed_function_.2} parent=27 // pred_check_branch
        %2023 = sbr.rel (%p2021) target = $region36
      $region35: #{_unnamed_function_.2} parent=27 // pred_region
        _
      $region36: #{_unnamed_function_.2} parent=27 // pred_fallthru
        _
      // Predicated region
      $region37: #{_unnamed_function_.2} parent=27 // pred_check
        %p2024 = pneg %p133
      $region38: #{_unnamed_function_.2} parent=27 // pred_check_branch
        %2026 = sbr.rel (%p2024) target = $region40
      $region39: #{_unnamed_function_.2} parent=27 // pred_region
        _
      $region40: #{_unnamed_function_.2} parent=27 // pred_fallthru
        _
    $region28: #{_unnamed_function_.2} parent=5 // pred_fallthru
      _
    %p2027 = scmp.le.s32.totalorder 2, %s11
    // Predicated region
    $region41: #{_unnamed_function_.2} parent=5 // pred_check
      %p2028 = pneg %p2027
    $region42: #{_unnamed_function_.2} parent=5 // pred_check_branch
      %2030 = sbr.rel (%p2028) target = $region44
    $region43: #{_unnamed_function_.2} parent=5 // pred_region
      %s2031 = ssub.s32 %s11, 2
      // Predicated region
      $region45: #{_unnamed_function_.2} parent=43 // pred_check
        %p2032 = pneg %p87
      $region46: #{_unnamed_function_.2} parent=43 // pred_check_branch
        %2034 = sbr.rel (%p2032) target = $region48
      $region47: #{_unnamed_function_.2} parent=43 // pred_region
        %p2035 = scmp.lt.s32.totalorder %s17, 1
        %s2036 = scalar_select %p2035, %s17, 1
        %s2037 = smul.addr %s2036, 8
        %s2038 = smul.addr %s2037, 4
        %s2039 = scalar_lea.vmem %s2, %s2038
      $region48: #{_unnamed_function_.2} parent=43 // pred_fallthru
        _
      // Predicated region
      $region49: #{_unnamed_function_.2} parent=43 // pred_check
        %p2040 = pneg %p113
      $region50: #{_unnamed_function_.2} parent=43 // pred_check_branch
        %2042 = sbr.rel (%p2040) target = $region52
      $region51: #{_unnamed_function_.2} parent=43 // pred_region
        %p2043 = scmp.lt.s32.totalorder %s17, 1
        %s2044 = scalar_select %p2043, %s17, 1
        %s2045 = scalar_lea.vmem %s3, %s2044
      $region52: #{_unnamed_function_.2} parent=43 // pred_fallthru
        _
      // Predicated region
      $region53: #{_unnamed_function_.2} parent=43 // pred_check
        %p2046 = pneg %p139
      $region54: #{_unnamed_function_.2} parent=43 // pred_check_branch
        %2048 = sbr.rel (%p2046) target = $region56
      $region55: #{_unnamed_function_.2} parent=43 // pred_region
        %p2049 = scmp.lt.s32.totalorder %s17, 1
        %s2050 = scalar_select %p2049, %s17, 1
        %s2051 = scalar_lea.vmem %s4, %s2050
      $region56: #{_unnamed_function_.2} parent=43 // pred_fallthru
        _
    $region44: #{_unnamed_function_.2} parent=5 // pred_fallthru
      _
  $region6: #{_unnamed_function_.2} parent=0 // loop_footer
    %s15 = sadd.s32 1, %s11
  $region7: #{_unnamed_function_.2} parent=0 // loop_footer_branch
    %10 = sbr.rel target = $region3
  $region8: #{_unnamed_function_.2} parent=0 // loop_exit
    _

// kernel: _unnamed_function_.3
$region0: #{_unnamed_function_.3}
  #allocation0 [shape = 'u32[]', space=smem, size = 0x4, offset = 0x4, fixed_abs, tag = 'smem constant byte address 0x4 - core index']
  #allocation1 [shape = 'u32[144,128]{1,0:T(1,128)}', space=vmem, size = 0x12000, scoped, tag = 'internal scratch']
  %s0 = inlined_call_operand.vmem [shape: bf16[2,64,128], index: 0, kind: input, shape index: {}]
  %s1 = inlined_call_operand.vmem [shape: f32[1,128], index: 1, kind: input, shape index: {}]
  %s2 = inlined_call_operand.vmem [shape: f32[1,128], index: 2, kind: input, shape index: {}]
  %s3 = inlined_call_operand.vmem [shape: f32[2,64,128], index: 3, kind: output, shape index: {}]
  %s4 = sld [smem:[#allocation0]]
  $region45: #{_unnamed_function_.3} parent=0
    _
  %s6 = ssub.s32 1, %s4
  %s7 = scalar_select 0, %s6, %s4
  loop: start=0, step=1, limit=4
  $region2: #{_unnamed_function_.3} parent=0 // loop_pre_header
    _
  $region3: #{_unnamed_function_.3} parent=0 // loop_header
    %s9 = sphi 0, %s13
    %p10 = scmp.ge.s32.totalorder %s9, 4
    %s16 = sphi 0, %s28
    %s17 = sphi 0, %s24
    %s18 = sphi 0, %s16
    %s19 = sphi 0, %s17
    %s20 = sphi 0, %s18
    %s21 = sphi 0, %s19
    %s33 = sphi 0, %s35
    %s36 = sphi 0, %s33
    %s37 = sphi 0, %s36
    %s53 = sphi 0, %s37
    %s57 = sphi 0, %s57
    %s59 = sphi 0, %s57
    %s60 = sphi 0, %s59
    %s74 = sphi 0, %s60
    %s78 = sphi 0, %s78
    %s80 = sphi 0, %s78
    %s81 = sphi 0, %s80
    %s95 = sphi 0, %s81
    %s103 = sphi 0, %s105
    %s106 = sphi 0, %s103
    %s107 = sphi 0, %s106
    %s123 = sphi 0, %s107
  $region4: #{_unnamed_function_.3} parent=0 // loop_header_branch
    %12 = sbr.rel (%p10) target = $region8
  $region5: #{_unnamed_function_.3} parent=0 // loop_body
    %s14 = ssub.s32 %s9, 1
    %s15 = ssub.s32 %s9, 2
    %s22 = sadd.s32 1, %s17
    %p23 = scmp.ge.s32.totalorder %s22, 1
    %s24 = scalar_select %p23, 0, %s22
    %s25 = sadd.s32 1, %s16
    %s26 = scalar_select %p23, %s25, %s16
    %p27 = scmp.ge.s32.totalorder %s26, 2
    %s28 = scalar_select %p27, 0, %s26
    %s29 = ssub.s32 %s16, %s28
    %s30 = ssub.s32 %s17, %s24
    %s31 = sor.u32 %s29, %s30
    %p32 = scmp.eq.s32.totalorder %s31, 0
    %s34 = sadd.s32 %s33, 1
    %s35 = scalar_select %p32, %s33, %s34
    %p38 = pneg %p32
    %p39 = scmp.eq.s32.totalorder %s9, 1
    %p40 = por %p38, %p39
    %p41 = scmp.ne.s32.totalorder %s33, %s36
    %p42 = scmp.eq.s32.totalorder %s9, 0
    %p43 = por %p41, %p42
    %p44 = scmp.ne.s32.totalorder %s33, %s36
    %p45 = scmp.eq.s32.totalorder %s14, 1
    %p46 = por %p44, %p45
    %p47 = scmp.ne.s32.totalorder %s36, %s37
    %p48 = scmp.eq.s32.totalorder %s14, 0
    %p49 = por %p47, %p48
    %p50 = scmp.ne.s32.totalorder %s36, %s37
    %p51 = scmp.eq.s32.totalorder %s15, 1
    %p52 = por %p50, %p51
    %p54 = scmp.ne.s32.totalorder %s37, %s53
    %p55 = scmp.eq.s32.totalorder %s15, 0
    %p56 = por %p54, %p55
    %s58 = sadd.s32 %s57, 1
    %p61 = scmp.eq.s32.totalorder %s9, 1
    %p62 = scmp.ne.s32.totalorder %s57, %s59
    %p63 = scmp.eq.s32.totalorder %s9, 0
    %p64 = por %p62, %p63
    %p65 = scmp.ne.s32.totalorder %s57, %s59
    %p66 = scmp.eq.s32.totalorder %s14, 1
    %p67 = por %p65, %p66
    %p68 = scmp.ne.s32.totalorder %s59, %s60
    %p69 = scmp.eq.s32.totalorder %s14, 0
    %p70 = por %p68, %p69
    %p71 = scmp.ne.s32.totalorder %s59, %s60
    %p72 = scmp.eq.s32.totalorder %s15, 1
    %p73 = por %p71, %p72
    %p75 = scmp.ne.s32.totalorder %s60, %s74
    %p76 = scmp.eq.s32.totalorder %s15, 0
    %p77 = por %p75, %p76
    %s79 = sadd.s32 %s78, 1
    %p82 = scmp.eq.s32.totalorder %s9, 1
    %p83 = scmp.ne.s32.totalorder %s78, %s80
    %p84 = scmp.eq.s32.totalorder %s9, 0
    %p85 = por %p83, %p84
    %p86 = scmp.ne.s32.totalorder %s78, %s80
    %p87 = scmp.eq.s32.totalorder %s14, 1
    %p88 = por %p86, %p87
    %p89 = scmp.ne.s32.totalorder %s80, %s81
    %p90 = scmp.eq.s32.totalorder %s14, 0
    %p91 = por %p89, %p90
    %p92 = scmp.ne.s32.totalorder %s80, %s81
    %p93 = scmp.eq.s32.totalorder %s15, 1
    %p94 = por %p92, %p93
    %p96 = scmp.ne.s32.totalorder %s81, %s95
    %p97 = scmp.eq.s32.totalorder %s15, 0
    %p98 = por %p96, %p97
    %s99 = ssub.s32 %s16, %s28
    %s100 = ssub.s32 %s17, %s24
    %s101 = sor.u32 %s99, %s100
    %p102 = scmp.eq.s32.totalorder %s101, 0
    %s104 = sadd.s32 %s103, 1
    %s105 = scalar_select %p102, %s103, %s104
    %p108 = pneg %p102
    %p109 = scmp.eq.s32.totalorder %s9, 1
    %p110 = por %p108, %p109
    %p111 = scmp.ne.s32.totalorder %s103, %s106
    %p112 = scmp.eq.s32.totalorder %s9, 0
    %p113 = por %p111, %p112
    %p114 = scmp.ne.s32.totalorder %s103, %s106
    %p115 = scmp.eq.s32.totalorder %s14, 1
    %p116 = por %p114, %p115
    %p117 = scmp.ne.s32.totalorder %s106, %s107
    %p118 = scmp.eq.s32.totalorder %s14, 0
    %p119 = por %p117, %p118
    %p120 = scmp.ne.s32.totalorder %s106, %s107
    %p121 = scmp.eq.s32.totalorder %s15, 1
    %p122 = por %p120, %p121
    %p124 = scmp.ne.s32.totalorder %s107, %s123
    %p125 = scmp.eq.s32.totalorder %s15, 0
    %p126 = por %p124, %p125
    %p127 = scmp.le.s32.totalorder 1, %s9
    %p128 = scmp.lt.s32.totalorder %s9, 3
    %p129 = pnand %p127, %p128
    %p130 = pneg %p129
    // Predicated region
    $region9: #{_unnamed_function_.3} parent=5 // pred_check
      _
    $region10: #{_unnamed_function_.3} parent=5 // pred_check_branch
      %132 = sbr.rel (%p129) target = $region12
    $region11: #{_unnamed_function_.3} parent=5 // pred_region
      %s133 = ssub.s32 %s9, 1
      // Predicated region
      $region13: #{_unnamed_function_.3} parent=11 // pred_check
        %p134 = pneg %p70
      $region14: #{_unnamed_function_.3} parent=11 // pred_check_branch
        %136 = sbr.rel (%p134) target = $region16
      $region15: #{_unnamed_function_.3} parent=11 // pred_region
        _
      $region16: #{_unnamed_function_.3} parent=11 // pred_fallthru
        _
      // Predicated region
      $region17: #{_unnamed_function_.3} parent=11 // pred_check
        %p137 = pneg %p91
      $region18: #{_unnamed_function_.3} parent=11 // pred_check_branch
        %139 = sbr.rel (%p137) target = $region20
      $region19: #{_unnamed_function_.3} parent=11 // pred_region
        _
      $region20: #{_unnamed_function_.3} parent=11 // pred_fallthru
        _
    $region12: #{_unnamed_function_.3} parent=5 // pred_fallthru
      _
    %p140 = scmp.lt.s32.totalorder %s9, 2
    // Predicated region
    $region21: #{_unnamed_function_.3} parent=5 // pred_check
      %p141 = pneg %p140
    $region22: #{_unnamed_function_.3} parent=5 // pred_check_branch
      %143 = sbr.rel (%p141) target = $region24
    $region23: #{_unnamed_function_.3} parent=5 // pred_region
      // Predicated region
      $region25: #{_unnamed_function_.3} parent=23 // pred_check
        %p144 = pneg %p43
      $region26: #{_unnamed_function_.3} parent=23 // pred_check_branch
        %146 = sbr.rel (%p144) target = $region28
      $region27: #{_unnamed_function_.3} parent=23 // pred_region
        %s147 = smul.u32 8, %s17
        %p148 = scmp.lt.s32.totalorder %s16, 1
        %s149 = scalar_select %p148, %s16, 1
        %p150 = scmp.lt.s32.totalorder %s147, 7
        %s151 = scalar_select %p150, %s147, 7
        %s152 = smul.addr %s149, 8
        %s153 = sadd.s32 %s151, %s152
        %s154 = smul.addr %s153, 4
        %s155 = scalar_lea.vmem %s0, %s154
        %s156 = smul.u32 8, %s17
      $region28: #{_unnamed_function_.3} parent=23 // pred_fallthru
        _
    $region24: #{_unnamed_function_.3} parent=5 // pred_fallthru
      _
    %p157 = scmp.le.s32.totalorder 1, %s9
    %p158 = scmp.lt.s32.totalorder %s9, 3
    %p159 = pnand %p157, %p158
    %p160 = pneg %p159
    // Predicated region
    $region29: #{_unnamed_function_.3} parent=5 // pred_check
      _
    $region30: #{_unnamed_function_.3} parent=5 // pred_check_branch
      %162 = sbr.rel (%p159) target = $region32
    $region31: #{_unnamed_function_.3} parent=5 // pred_region
      %s163 = ssub.s32 %s9, 1
      %s164 = smul.u32 8, %s19
      %p165 = scmp.lt.s32.totalorder %s18, 1
      %s166 = scalar_select %p165, %s18, 1
      %p167 = scmp.lt.s32.totalorder %s164, 7
      %s168 = scalar_select %p167, %s164, 7
      %s169 = smul.addr %s166, 8
      %s170 = sadd.s32 %s168, %s169
      %s171 = smul.addr %s170, 4
      %s172 = scalar_lea.vmem %s0, %s171
      %p173 = pneg %p49
      %p174 = pneg %p46
      %p175 = pneg %p70
      %p176 = pneg %p67
      %p177 = pneg %p91
      %p178 = pneg %p88
      %p179 = pneg %p119
      %p180 = pneg %p116
      %s181 = smul.u32 8, %s19
      %p182 = scmp.lt.s32.totalorder %s18, 1
      %s183 = scalar_select %p182, %s18, 1
      %p184 = scmp.lt.s32.totalorder %s181, 7
      %s185 = scalar_select %p184, %s181, 7
      %s186 = smul.addr %s183, 8
      %s187 = sadd.s32 %s185, %s186
      %s188 = smul.addr %s187, 8
      %s189 = scalar_lea.vmem %s3, %s188
      %s190 = smul.u32 8, %s19
      %p191 = scmp.lt.s32.totalorder %s18, 1
      %s192 = scalar_select %p191, %s18, 1
      %p193 = scmp.lt.s32.totalorder %s190, 7
      %s194 = scalar_select %p193, %s190, 7
      %s195 = smul.addr %s192, 8
      %s196 = sadd.s32 %s194, %s195
      %s197 = smul.addr %s196, 4
      %s198 = scalar_lea.vmem %s0, %s197
      %s199 = smul.u32 8, %s19
      %s200 = smul.u32 8, %s19
      %p201 = scmp.lt.s32.totalorder %s18, 1
      %s202 = scalar_select %p201, %s18, 1
      %p203 = scmp.lt.s32.totalorder %s200, 7
      %s204 = scalar_select %p203, %s200, 7
      %s205 = smul.addr %s202, 8
      %s206 = sadd.s32 %s204, %s205
      %s207 = smul.addr %s206, 8
      %s208 = scalar_lea.vmem %s3, %s207
      %s209 = smul.u32 8, %s19
      %v210 = vld [vmem:[%s198] sm:$0xf]
      %v211 = vld [vmem:[%s198 + $0x4] sm:$0xf]
      %v212 = vld [vmem:[%s198 + $0x8] sm:$0xf]
      %v213 = vld [vmem:[%s198 + $0xc] sm:$0xf]
      %v214 = vld [vmem:[%s198 + $0x10] sm:$0xf]
      %v215 = vld [vmem:[%s198 + $0x14] sm:$0xf]
      %v216 = vld [vmem:[%s198 + $0x18] sm:$0xf]
      %v217 = vld [vmem:[%s198 + $0x1c] sm:$0xf]
      %v218 = vunpack.c.l.bf16 %v210
      %v219 = vunpack.c.l.bf16 %v211
      %v220 = vunpack.c.l.bf16 %v212
      %v221 = vunpack.c.l.bf16 %v213
      %v222 = vunpack.c.l.bf16 %v214
      %v223 = vunpack.c.l.bf16 %v215
      %v224 = vunpack.c.l.bf16 %v216
      %v225 = vunpack.c.l.bf16 %v217
      %v226 = vld [vmem:[%s1] sm:$0x1]
      %v228 = vlaneseq
      %v229 = vshrl.u32 %v228, 7
      %v230 = vsub.s32 0, %v229
      %v231 = vrot.slane %v226, %v230
      %v233 = vmul.f32 %v218, %v231
      %v234 = vmul.f32 %v219, %v231
      %v235 = vmul.f32 %v220, %v231
      %v236 = vmul.f32 %v221, %v231
      %v237 = vmul.f32 %v222, %v231
      %v238 = vmul.f32 %v223, %v231
      %v239 = vmul.f32 %v224, %v231
      %v240 = vmul.f32 %v225, %v231
      %v241 = vld [vmem:[%s2] sm:$0x1]
      %v243 = vlaneseq
      %v244 = vshrl.u32 %v243, 7
      %v245 = vsub.s32 0, %v244
      %v246 = vrot.slane %v241, %v245
      %v248 = vadd.f32 %v233, %v246
      %v249 = vadd.f32 %v234, %v246
      %v250 = vadd.f32 %v235, %v246
      %v251 = vadd.f32 %v236, %v246
      %v252 = vadd.f32 %v237, %v246
      %v253 = vadd.f32 %v238, %v246
      %v254 = vadd.f32 %v239, %v246
      %v255 = vadd.f32 %v240, %v246
      %v256 = vmax.f32 %v248, 0.0
      %v257 = vmax.f32 %v249, 0.0
      %v258 = vmax.f32 %v250, 0.0
      %v259 = vmax.f32 %v251, 0.0
      %v260 = vmax.f32 %v252, 0.0
      %v261 = vmax.f32 %v253, 0.0
      %v262 = vmax.f32 %v254, 0.0
      %v263 = vmax.f32 %v255, 0.0
      %264 = vst [vmem:[%s208] sm:$0xff] %v256
      %265 = vst [vmem:[%s208 + $0x8] sm:$0xff] %v257
      %266 = vst [vmem:[%s208 + $0x10] sm:$0xff] %v258
      %267 = vst [vmem:[%s208 + $0x18] sm:$0xff] %v259
      %268 = vst [vmem:[%s208 + $0x20] sm:$0xff] %v260
      %269 = vst [vmem:[%s208 + $0x28] sm:$0xff] %v261
      %270 = vst [vmem:[%s208 + $0x30] sm:$0xff] %v262
      %271 = vst [vmem:[%s208 + $0x38] sm:$0xff] %v263
      %s272 = smul.u32 8, %s19
      %p273 = scmp.lt.s32.totalorder %s18, 1
      %s274 = scalar_select %p273, %s18, 1
      %p275 = scmp.lt.s32.totalorder %s272, 7
      %s276 = scalar_select %p275, %s272, 7
      %s277 = smul.addr %s274, 8
      %s278 = sadd.s32 %s276, %s277
      %s279 = smul.addr %s278, 8
      %s280 = scalar_lea.vmem %s3, %s279
      // Predicated region
      $region33: #{_unnamed_function_.3} parent=31 // pred_check
        %p281 = pneg %p116
      $region34: #{_unnamed_function_.3} parent=31 // pred_check_branch
        %283 = sbr.rel (%p281) target = $region36
      $region35: #{_unnamed_function_.3} parent=31 // pred_region
        %s284 = smul.u32 8, %s19
      $region36: #{_unnamed_function_.3} parent=31 // pred_fallthru
        _
    $region32: #{_unnamed_function_.3} parent=5 // pred_fallthru
      _
    %p285 = scmp.le.s32.totalorder 2, %s9
    // Predicated region
    $region37: #{_unnamed_function_.3} parent=5 // pred_check
      %p286 = pneg %p285
    $region38: #{_unnamed_function_.3} parent=5 // pred_check_branch
      %288 = sbr.rel (%p286) target = $region40
    $region39: #{_unnamed_function_.3} parent=5 // pred_region
      %s289 = ssub.s32 %s9, 2
      // Predicated region
      $region41: #{_unnamed_function_.3} parent=39 // pred_check
        %p290 = pneg %p122
      $region42: #{_unnamed_function_.3} parent=39 // pred_check_branch
        %292 = sbr.rel (%p290) target = $region44
      $region43: #{_unnamed_function_.3} parent=39 // pred_region
        %s293 = smul.u32 8, %s21
        %p294 = scmp.lt.s32.totalorder %s20, 1
        %s295 = scalar_select %p294, %s20, 1
        %p296 = scmp.lt.s32.totalorder %s293, 7
        %s297 = scalar_select %p296, %s293, 7
        %s298 = smul.addr %s295, 8
        %s299 = sadd.s32 %s297, %s298
        %s300 = smul.addr %s299, 8
        %s301 = scalar_lea.vmem %s3, %s300
      $region44: #{_unnamed_function_.3} parent=39 // pred_fallthru
        _
    $region40: #{_unnamed_function_.3} parent=5 // pred_fallthru
      _
  $region6: #{_unnamed_function_.3} parent=0 // loop_footer
    %s13 = sadd.s32 1, %s9
  $region7: #{_unnamed_function_.3} parent=0 // loop_footer_branch
    %8 = sbr.rel target = $region3
  $region8: #{_unnamed_function_.3} parent=0 // loop_exit
    _

</llo_original>
